<compile_context>
chip_gen: v5e
topology: v5e:2x2
jax: 0.10.0
libtpu: 0.0.40
codegen_flags: <defaults>
</compile_context>

<pallas_src>
import functools

import jax
import jax.numpy as jnp
from jax import lax
from jax.experimental import pallas as pl
from jax.experimental.pallas import tpu as pltpu

LANE = 128
MIB = 1 << 20


def _round_up(v, m):
    return ((v + m - 1) // m) * m


def _pad2d(x, rows, cols):
    r, c = x.shape
    return jnp.pad(x, ((0, rows - r), (0, cols - c)))


def _pick_tile(dim, desired, step=LANE):
    """Largest multiple of `step` <= desired that divides the padded dim."""
    t = min(desired, dim)
    t = max(step, (t // step) * step)
    while dim % t:
        t -= step
    return t


def _compiler_params(dim_sem, buffer_bytes):
    vmem = int(buffer_bytes) + 8 * MIB          # headroom for Mosaic scratch
    vmem = max(24 * MIB, min(vmem, 56 * MIB))   # v7x (64 MiB physical) safe cap
    return pltpu.CompilerParams(dimension_semantics=dim_sem,
                                vmem_limit_bytes=vmem)


# ---------------------------------------------------------------------------
# Kernel 1: generic streamed matmul  O = A @ B  (bf16 operands, f32 accum)
#   Used for every non-final hop / linear step; output stored as bf16 so the
#   next matmul reads half the bytes and needs no in-kernel cast.
# ---------------------------------------------------------------------------
def _mm_kernel(a_ref, b_ref, o_ref, acc_ref):
    @pl.when(pl.program_id(2) == 0)
    def _():
        acc_ref[...] = jnp.zeros_like(acc_ref)

    acc_ref[...] += jnp.dot(a_ref[...], b_ref[...],
                            preferred_element_type=jnp.float32)

    @pl.when(pl.program_id(2) == pl.num_programs(2) - 1)
    def _():
        o_ref[...] = acc_ref[...].astype(o_ref.dtype)


def _matmul(a, b, *, out_dtype=jnp.bfloat16, tm=512, tn=512, tk=2048):
    M, K = a.shape
    _, N = b.shape
    tm = _pick_tile(M, tm)
    tn = _pick_tile(N, tn)
    tk = _pick_tile(K, tk)
    grid = (M // tm, N // tn, K // tk)
    a_i, b_i = jnp.dtype(a.dtype).itemsize, jnp.dtype(b.dtype).itemsize
    o_i = jnp.dtype(out_dtype).itemsize
    bufs = (2 * tm * tk * a_i        # streamed A tiles (double-buffered)
            + 2 * tk * tn * b_i      # streamed B tiles (double-buffered)
            + 2 * tm * tn * o_i      # output tile
            + tm * tn * 4)           # f32 accumulator scratch
    return pl.pallas_call(
        _mm_kernel,
        out_shape=jax.ShapeDtypeStruct((M, N), out_dtype),
        grid_spec=pltpu.PrefetchScalarGridSpec(
            num_scalar_prefetch=0,
            grid=grid,
            in_specs=[pl.BlockSpec((tm, tk), lambda i, j, k: (i, k)),
                      pl.BlockSpec((tk, tn), lambda i, j, k: (k, j))],
            out_specs=pl.BlockSpec((tm, tn), lambda i, j, k: (i, j)),
            scratch_shapes=[pltpu.VMEM((tm, tn), jnp.float32)]),
        compiler_params=_compiler_params(("parallel", "parallel", "arbitrary"),
                                         bufs),
        cost_estimate=pl.CostEstimate(
            flops=2 * M * N * K,
            transcendentals=0,
            bytes_accessed=M * K * a_i + K * N * b_i + M * N * o_i),
    )(a, b)


# ---------------------------------------------------------------------------
# Kernel 2: final matmul with fused epilogue
#   O = A @ B + bias, then (+ residual) or masked log_softmax, stored f32.
#   Full output feature width lives in one block (it is the class/feature
#   dim, padded to a lane multiple) so the row-wise softmax is local.
# ---------------------------------------------------------------------------
def _mm_epilogue_kernel(*refs, out_feats, is_class, residual):
    if residual:
        a_ref, b_ref, bias_ref, x_ref, o_ref, acc_ref = refs
    else:
        a_ref, b_ref, bias_ref, o_ref, acc_ref = refs
    k = pl.program_id(1)

    @pl.when(k == 0)
    def _():
        acc_ref[...] = jnp.zeros_like(acc_ref)

    acc_ref[...] += jnp.dot(a_ref[...], b_ref[...],
                            preferred_element_type=jnp.float32)

    @pl.when(k == pl.num_programs(1) - 1)
    def _():
        y = acc_ref[...] + bias_ref[...]
        if is_class:
            lane = lax.broadcasted_iota(jnp.int32, y.shape, 1)
            valid = lane < out_feats                    # mask lane padding
            yv = jnp.where(valid, y, jnp.float32(-1e30))
            m = jnp.max(yv, axis=1, keepdims=True)
            z = yv - m
            denom = jnp.sum(jnp.where(valid, jnp.exp(z), 0.0),
                            axis=1, keepdims=True)
            o_ref[...] = jnp.where(valid, z - jnp.log(denom), 0.0)
        else:
            if residual:
                y = y + x_ref[...]
            o_ref[...] = y


def _matmul_epilogue(a, b, bias_p, x_res, *, out_feats, is_class, residual,
                     tm=512, tk=2048):
    M, K = a.shape
    N = b.shape[1]
    tm = _pick_tile(M, tm)
    tk = _pick_tile(K, tk)
    grid = (M // tm, K // tk)
    a_i, b_i = jnp.dtype(a.dtype).itemsize, jnp.dtype(b.dtype).itemsize
    in_specs = [pl.BlockSpec((tm, tk), lambda i, k: (i, k)),
                pl.BlockSpec((tk, N), lambda i, k: (k, 0)),
                pl.BlockSpec((1, N), lambda i, k: (0, 0))]
    args = [a, b, bias_p]
    bufs = (2 * tm * tk * a_i + 2 * tk * N * b_i + 2 * N * 4
            + 2 * tm * N * 4 + tm * N * 4)
    if residual:
        in_specs.append(pl.BlockSpec((tm, N), lambda i, k: (i, 0)))
        args.append(x_res)
        bufs += 2 * tm * N * 4
    kernel = functools.partial(_mm_epilogue_kernel, out_feats=out_feats,
                               is_class=is_class, residual=residual)
    return pl.pallas_call(
        kernel,
        out_shape=jax.ShapeDtypeStruct((M, N), jnp.float32),
        grid_spec=pltpu.PrefetchScalarGridSpec(
            num_scalar_prefetch=0,
            grid=grid,
            in_specs=in_specs,
            out_specs=pl.BlockSpec((tm, N), lambda i, k: (i, 0)),
            scratch_shapes=[pltpu.VMEM((tm, N), jnp.float32)]),
        compiler_params=_compiler_params(("parallel", "arbitrary"), bufs),
        cost_estimate=pl.CostEstimate(
            flops=2 * M * N * K,
            transcendentals=(M * N if is_class else 0),
            bytes_accessed=M * K * a_i + K * N * b_i + M * N * 4),
    )(*args)


# ---------------------------------------------------------------------------
# Wrapper
# ---------------------------------------------------------------------------
def sgc_forward(x, a_hat, weight, bias, *, k, is_class=False, residual=False,
                a_dtype=jnp.bfloat16, row_tile=512, col_tile=2048):
    """x: (N, in_feats) f32; a_hat: (N, N) f32 gcn-normalized adjacency;
       weight: (out_feats, in_feats) (PyTorch Linear layout); bias: (out_feats,)."""
    n, in_feats = x.shape
    out_feats = weight.shape[0]
    if residual and out_feats != in_feats:
        raise ValueError("residual requires out_feats == in_feats")

    # Round N only to the row tile; the contraction tile is chosen as a
    # divisor of n_p inside _pick_tile (no quadratic padding of A).
    tm = min(row_tile, _round_up(n, LANE))
    n_p = _round_up(n, tm)
    fin_p = _round_up(in_feats, LANE)
    fout_p = _round_up(out_feats, LANE)

    # bf16 operands, cast ONCE here (f32 accumulation happens on the MXU).
    a_p = _pad2d(a_hat, n_p, n_p).astype(a_dtype)
    x_bf = _pad2d(x, n_p, fin_p).astype(jnp.bfloat16)
    wt_bf = _pad2d(weight.T, fin_p, fout_p).astype(jnp.bfloat16)  # pre-transposed
    b_p = _pad2d(bias.reshape(1, -1).astype(jnp.float32), 1, fout_p)

    apply_residual = residual and not is_class   # matches PyTorch control flow
    x_res = (_pad2d(x.astype(jnp.float32), n_p, fout_p)
             if apply_residual else None)

    epi = functools.partial(_matmul_epilogue, out_feats=out_feats,
                            is_class=is_class, residual=apply_residual,
                            tm=tm, tk=col_tile)

    if k == 0:
        y_p = epi(x_bf, wt_bf, b_p, x_res)
        return y_p[:n, :out_feats]

    # Matmul associativity: propagate the narrower feature width.
    linear_first = out_feats <= in_feats
    if linear_first:
        h = _matmul(x_bf, wt_bf, out_dtype=jnp.bfloat16,
                    tm=tm, tn=512, tk=col_tile)
        for _ in range(k - 1):
            h = _matmul(a_p, h, out_dtype=jnp.bfloat16,
                        tm=tm, tn=512, tk=col_tile)
        y_p = epi(a_p, h, b_p, x_res)              # last hop + fused epilogue
    else:
        h = x_bf
        for _ in range(k):
            h = _matmul(a_p, h, out_dtype=jnp.bfloat16,
                        tm=tm, tn=512, tk=col_tile)
        y_p = epi(h, wt_bf, b_p, x_res)            # linear + fused epilogue
    return y_p[:n, :out_feats]


# ---------------------------------------------------------------------------
# Plain-JAX glue + reference
# ---------------------------------------------------------------------------
def build_gcn_norm_adjacency(edge_index, num_nodes):
    """Dense equivalent of PyG gcn_norm with added self loops:
       A_hat = D^-1/2 (A + I) D^-1/2 (symmetrized edges, duplicates deduped)."""
    row, col = edge_index
    a = jnp.zeros((num_nodes, num_nodes), jnp.float32)
    a = a.at[row, col].max(1.0)
    a = jnp.maximum(a, a.T)
    a = a + jnp.eye(num_nodes, dtype=jnp.float32)
    deg = a.sum(axis=1)
    dinv = jnp.where(deg > 0, lax.rsqrt(deg), 0.0)
    return dinv[:, None] * a * dinv[None, :]


def reference_sgc(x, a_hat, weight, bias, *, k, is_class, residual):
    h = x
    for _ in range(k):
        h = a_hat @ h
    y = h @ weight.T + bias[None, :]
    if is_class:
        return jax.nn.log_softmax(y, axis=1)
    if residual:
        y = y + x
    return y


if __name__ == "__main__":
    key = jax.random.PRNGKey(0)
    k_x, k_e, k_w, k_b = jax.random.split(key, 4)

    N = 256          # graph nodes
    IN_FEATS = 32
    OUT_FEATS = 32   # equal to IN_FEATS so the residual branch is well defined
    K = 2
    E = 1024         # random directed edges (symmetrized below)

    x = jax.random.normal(k_x, (N, IN_FEATS), jnp.float32)
    edge_index = jax.random.randint(k_e, (2, E), 0, N, jnp.int32)
    a_hat = build_gcn_norm_adjacency(edge_index, N)

    weight = jax.random.normal(k_w, (OUT_FEATS, IN_FEATS), jnp.float32) * 0.1
    bias = jax.random.normal(k_b, (OUT_FEATS,), jnp.float32) * 0.1

    ok = True
    for is_class, residual in [(False, False), (False, True), (True, False)]:
        fwd = jax.jit(functools.partial(sgc_forward, k=K, is_class=is_class,
                                        residual=residual))
        out = jax.block_until_ready(fwd(x, a_hat, weight, bias))
        ref = reference_sgc(x, a_hat, weight, bias,
                            k=K, is_class=is_class, residual=residual)
        # Loose tolerance: kernel intentionally uses bf16 operands throughout
        # (adjacency, features, weights, inter-hop H) with f32 accumulation;
        # the reference is full f32.
        ok = ok and bool(jnp.allclose(out, ref, atol=5e-2, rtol=5e-2))

    if ok:
        print("KERNEL_OK")
    else:
        print("KERNEL_MISMATCH")
</pallas_src>

<mosaic_0001>
module attributes {stable_mosaic.version = 11 : i64} {
  func.func @_mm_kernel(%arg0: i32, %arg1: i32, %arg2: i32, %arg3: memref<256x128xbf16, #tpu.memory_space<vmem>>, %arg4: memref<128x128xbf16, #tpu.memory_space<vmem>>, %arg5: memref<256x128xbf16, #tpu.memory_space<vmem>>, %arg6: memref<256x128xf32, #tpu.memory_space<vmem>>) attributes {dimension_semantics = [#tpu.dimension_semantics<parallel>, #tpu.dimension_semantics<parallel>, #tpu.dimension_semantics<arbitrary>], iteration_bounds = array<i64: 1, 1, 1>, scalar_prefetch = 0 : i64, scratch_operands = 1 : i64, tpu.core_type = #tpu.core_type<tc>, window_params = [{transform_indices = @transform_0, window_bounds = array<i64: 256, 128>}, {transform_indices = @transform_1, window_bounds = array<i64: 128, 128>}, {transform_indices = @transform_2, window_bounds = array<i64: 256, 128>}]} {
    %c0_i32 = arith.constant 0 : i32
    %0 = arith.cmpi eq, %arg2, %c0_i32 : i32
    %1 = arith.extui %0 : i1 to i32
    %c0_i32_0 = arith.constant 0 : i32
    %2 = arith.cmpi ne, %1, %c0_i32_0 : i32
    scf.if %2 {
      %cst_10 = arith.constant 0.000000e+00 : f32
      %12 = vector.broadcast %cst_10 : f32 to vector<256x128xf32>
      %c0_11 = arith.constant 0 : index
      %c0_12 = arith.constant 0 : index
      %13 = vector.load %arg6[%c0_11, %c0_12] : memref<256x128xf32, #tpu.memory_space<vmem>>, vector<256x128xf32>
      tpu.vector_store %arg6[%c0_11, %c0_12], %12 {strides = array<i32>} : memref<256x128xf32, #tpu.memory_space<vmem>>, vector<256x128xf32>,
    } else {
    }
    %c0 = arith.constant 0 : index
    %c0_1 = arith.constant 0 : index
    %3 = vector.load %arg6[%c0, %c0_1] : memref<256x128xf32, #tpu.memory_space<vmem>>, vector<256x128xf32>
    %c0_2 = arith.constant 0 : index
    %c0_3 = arith.constant 0 : index
    %4 = vector.load %arg3[%c0_2, %c0_3] : memref<256x128xbf16, #tpu.memory_space<vmem>>, vector<256x128xbf16>
    %c0_4 = arith.constant 0 : index
    %c0_5 = arith.constant 0 : index
    %5 = vector.load %arg4[%c0_4, %c0_5] : memref<128x128xbf16, #tpu.memory_space<vmem>>, vector<128x128xbf16>
    %cst = arith.constant dense<0.000000e+00> : vector<256x128xf32>
    %6 = tpu.matmul %4, %5, %cst {dimension_numbers = #tpu.dot_dimension_numbers<[1], [0], [0], [1], [0, 0, 1, 1], [], []>} : vector<256x128xbf16>, vector<128x128xbf16>, vector<256x128xf32> -> vector<256x128xf32>
    %7 = arith.addf %3, %6 : vector<256x128xf32>
    %c0_6 = arith.constant 0 : index
    %c0_7 = arith.constant 0 : index
    %8 = vector.load %arg6[%c0_6, %c0_7] : memref<256x128xf32, #tpu.memory_space<vmem>>, vector<256x128xf32>
    tpu.vector_store %arg6[%c0_6, %c0_7], %7 {strides = array<i32>} : memref<256x128xf32, #tpu.memory_space<vmem>>, vector<256x128xf32>,
    %c0_i32_8 = arith.constant 0 : i32
    %9 = arith.cmpi eq, %arg2, %c0_i32_8 : i32
    %10 = arith.extui %9 : i1 to i32
    %c0_i32_9 = arith.constant 0 : i32
    %11 = arith.cmpi ne, %10, %c0_i32_9 : i32
    scf.if %11 {
      %c0_10 = arith.constant 0 : index
      %c0_11 = arith.constant 0 : index
      %12 = vector.load %arg6[%c0_10, %c0_11] : memref<256x128xf32, #tpu.memory_space<vmem>>, vector<256x128xf32>
      %13 = arith.truncf %12 : vector<256x128xf32> to vector<256x128xbf16>
      %c0_12 = arith.constant 0 : index
      %c0_13 = arith.constant 0 : index
      %14 = vector.load %arg5[%c0_12, %c0_13] : memref<256x128xbf16, #tpu.memory_space<vmem>>, vector<256x128xbf16>
      tpu.vector_store %arg5[%c0_12, %c0_13], %13 {strides = array<i32>} : memref<256x128xbf16, #tpu.memory_space<vmem>>, vector<256x128xbf16>,
    } else {
    }
    return
  }
  func.func @transform_0(%arg0: i32, %arg1: i32, %arg2: i32) -> (i32, i32) {
    %c0_i32 = arith.constant 0 : i32
    return %arg0, %arg2 : i32, i32
  }
  func.func @transform_1(%arg0: i32, %arg1: i32, %arg2: i32) -> (i32, i32) {
    %c0_i32 = arith.constant 0 : i32
    return %arg2, %arg1 : i32, i32
  }
  func.func @transform_2(%arg0: i32, %arg1: i32, %arg2: i32) -> (i32, i32) {
    %c0_i32 = arith.constant 0 : i32
    return %arg0, %arg1 : i32, i32
  }
}

module attributes {stable_mosaic.version = 11 : i64} {
  func.func @_mm_kernel(%arg0: i32, %arg1: i32, %arg2: i32, %arg3: memref<256x256xbf16, #tpu.memory_space<vmem>>, %arg4: memref<256x128xbf16, #tpu.memory_space<vmem>>, %arg5: memref<256x128xbf16, #tpu.memory_space<vmem>>, %arg6: memref<256x128xf32, #tpu.memory_space<vmem>>) attributes {dimension_semantics = [#tpu.dimension_semantics<parallel>, #tpu.dimension_semantics<parallel>, #tpu.dimension_semantics<arbitrary>], iteration_bounds = array<i64: 1, 1, 1>, scalar_prefetch = 0 : i64, scratch_operands = 1 : i64, tpu.core_type = #tpu.core_type<tc>, window_params = [{transform_indices = @transform_0, window_bounds = array<i64: 256, 256>}, {transform_indices = @transform_1, window_bounds = array<i64: 256, 128>}, {transform_indices = @transform_2, window_bounds = array<i64: 256, 128>}]} {
    %c0_i32 = arith.constant 0 : i32
    %0 = arith.cmpi eq, %arg2, %c0_i32 : i32
    %1 = arith.extui %0 : i1 to i32
    %c0_i32_0 = arith.constant 0 : i32
    %2 = arith.cmpi ne, %1, %c0_i32_0 : i32
    scf.if %2 {
      %cst_10 = arith.constant 0.000000e+00 : f32
      %12 = vector.broadcast %cst_10 : f32 to vector<256x128xf32>
      %c0_11 = arith.constant 0 : index
      %c0_12 = arith.constant 0 : index
      %13 = vector.load %arg6[%c0_11, %c0_12] : memref<256x128xf32, #tpu.memory_space<vmem>>, vector<256x128xf32>
      tpu.vector_store %arg6[%c0_11, %c0_12], %12 {strides = array<i32>} : memref<256x128xf32, #tpu.memory_space<vmem>>, vector<256x128xf32>,
    } else {
    }
    %c0 = arith.constant 0 : index
    %c0_1 = arith.constant 0 : index
    %3 = vector.load %arg6[%c0, %c0_1] : memref<256x128xf32, #tpu.memory_space<vmem>>, vector<256x128xf32>
    %c0_2 = arith.constant 0 : index
    %c0_3 = arith.constant 0 : index
    %4 = vector.load %arg3[%c0_2, %c0_3] : memref<256x256xbf16, #tpu.memory_space<vmem>>, vector<256x256xbf16>
    %c0_4 = arith.constant 0 : index
    %c0_5 = arith.constant 0 : index
    %5 = vector.load %arg4[%c0_4, %c0_5] : memref<256x128xbf16, #tpu.memory_space<vmem>>, vector<256x128xbf16>
    %cst = arith.constant dense<0.000000e+00> : vector<256x128xf32>
    %6 = tpu.matmul %4, %5, %cst {dimension_numbers = #tpu.dot_dimension_numbers<[1], [0], [0], [1], [0, 0, 1, 1], [], []>} : vector<256x256xbf16>, vector<256x128xbf16>, vector<256x128xf32> -> vector<256x128xf32>
    %7 = arith.addf %3, %6 : vector<256x128xf32>
    %c0_6 = arith.constant 0 : index
    %c0_7 = arith.constant 0 : index
    %8 = vector.load %arg6[%c0_6, %c0_7] : memref<256x128xf32, #tpu.memory_space<vmem>>, vector<256x128xf32>
    tpu.vector_store %arg6[%c0_6, %c0_7], %7 {strides = array<i32>} : memref<256x128xf32, #tpu.memory_space<vmem>>, vector<256x128xf32>,
    %c0_i32_8 = arith.constant 0 : i32
    %9 = arith.cmpi eq, %arg2, %c0_i32_8 : i32
    %10 = arith.extui %9 : i1 to i32
    %c0_i32_9 = arith.constant 0 : i32
    %11 = arith.cmpi ne, %10, %c0_i32_9 : i32
    scf.if %11 {
      %c0_10 = arith.constant 0 : index
      %c0_11 = arith.constant 0 : index
      %12 = vector.load %arg6[%c0_10, %c0_11] : memref<256x128xf32, #tpu.memory_space<vmem>>, vector<256x128xf32>
      %13 = arith.truncf %12 : vector<256x128xf32> to vector<256x128xbf16>
      %c0_12 = arith.constant 0 : index
      %c0_13 = arith.constant 0 : index
      %14 = vector.load %arg5[%c0_12, %c0_13] : memref<256x128xbf16, #tpu.memory_space<vmem>>, vector<256x128xbf16>
      tpu.vector_store %arg5[%c0_12, %c0_13], %13 {strides = array<i32>} : memref<256x128xbf16, #tpu.memory_space<vmem>>, vector<256x128xbf16>,
    } else {
    }
    return
  }
  func.func @transform_0(%arg0: i32, %arg1: i32, %arg2: i32) -> (i32, i32) {
    %c0_i32 = arith.constant 0 : i32
    return %arg0, %arg2 : i32, i32
  }
  func.func @transform_1(%arg0: i32, %arg1: i32, %arg2: i32) -> (i32, i32) {
    %c0_i32 = arith.constant 0 : i32
    return %arg2, %arg1 : i32, i32
  }
  func.func @transform_2(%arg0: i32, %arg1: i32, %arg2: i32) -> (i32, i32) {
    %c0_i32 = arith.constant 0 : i32
    return %arg0, %arg1 : i32, i32
  }
}

module attributes {stable_mosaic.version = 11 : i64} {
  func.func @_mm_epilogue_kernel(%arg0: i32, %arg1: i32, %arg2: memref<256x256xbf16, #tpu.memory_space<vmem>>, %arg3: memref<256x128xbf16, #tpu.memory_space<vmem>>, %arg4: memref<1x128xf32, #tpu.memory_space<vmem>>, %arg5: memref<256x128xf32, #tpu.memory_space<vmem>>, %arg6: memref<256x128xf32, #tpu.memory_space<vmem>>) attributes {dimension_semantics = [#tpu.dimension_semantics<parallel>, #tpu.dimension_semantics<arbitrary>], iteration_bounds = array<i64: 1, 1>, scalar_prefetch = 0 : i64, scratch_operands = 1 : i64, tpu.core_type = #tpu.core_type<tc>, window_params = [{transform_indices = @transform_0, window_bounds = array<i64: 256, 256>}, {transform_indices = @transform_1, window_bounds = array<i64: 256, 128>}, {pipeline_mode = #tpu.pipeline_mode<synchronous>, transform_indices = @transform_2, window_bounds = array<i64: 1, 128>}, {transform_indices = @transform_3, window_bounds = array<i64: 256, 128>}]} {
    %c0_i32 = arith.constant 0 : i32
    %0 = arith.cmpi eq, %arg1, %c0_i32 : i32
    %1 = arith.extui %0 : i1 to i32
    %c0_i32_0 = arith.constant 0 : i32
    %2 = arith.cmpi ne, %1, %c0_i32_0 : i32
    scf.if %2 {
      %cst_10 = arith.constant 0.000000e+00 : f32
      %12 = vector.broadcast %cst_10 : f32 to vector<256x128xf32>
      %c0_11 = arith.constant 0 : index
      %c0_12 = arith.constant 0 : index
      %13 = vector.load %arg6[%c0_11, %c0_12] : memref<256x128xf32, #tpu.memory_space<vmem>>, vector<256x128xf32>
      tpu.vector_store %arg6[%c0_11, %c0_12], %12 {strides = array<i32>} : memref<256x128xf32, #tpu.memory_space<vmem>>, vector<256x128xf32>,
    } else {
    }
    %c0 = arith.constant 0 : index
    %c0_1 = arith.constant 0 : index
    %3 = vector.load %arg6[%c0, %c0_1] : memref<256x128xf32, #tpu.memory_space<vmem>>, vector<256x128xf32>
    %c0_2 = arith.constant 0 : index
    %c0_3 = arith.constant 0 : index
    %4 = vector.load %arg2[%c0_2, %c0_3] : memref<256x256xbf16, #tpu.memory_space<vmem>>, vector<256x256xbf16>
    %c0_4 = arith.constant 0 : index
    %c0_5 = arith.constant 0 : index
    %5 = vector.load %arg3[%c0_4, %c0_5] : memref<256x128xbf16, #tpu.memory_space<vmem>>, vector<256x128xbf16>
    %cst = arith.constant dense<0.000000e+00> : vector<256x128xf32>
    %6 = tpu.matmul %4, %5, %cst {dimension_numbers = #tpu.dot_dimension_numbers<[1], [0], [0], [1], [0, 0, 1, 1], [], []>} : vector<256x256xbf16>, vector<256x128xbf16>, vector<256x128xf32> -> vector<256x128xf32>
    %7 = arith.addf %3, %6 : vector<256x128xf32>
    %c0_6 = arith.constant 0 : index
    %c0_7 = arith.constant 0 : index
    %8 = vector.load %arg6[%c0_6, %c0_7] : memref<256x128xf32, #tpu.memory_space<vmem>>, vector<256x128xf32>
    tpu.vector_store %arg6[%c0_6, %c0_7], %7 {strides = array<i32>} : memref<256x128xf32, #tpu.memory_space<vmem>>, vector<256x128xf32>,
    %c0_i32_8 = arith.constant 0 : i32
    %9 = arith.cmpi eq, %arg1, %c0_i32_8 : i32
    %10 = arith.extui %9 : i1 to i32
    %c0_i32_9 = arith.constant 0 : i32
    %11 = arith.cmpi ne, %10, %c0_i32_9 : i32
    scf.if %11 {
      %c0_10 = arith.constant 0 : index
      %c0_11 = arith.constant 0 : index
      %12 = vector.load %arg6[%c0_10, %c0_11] : memref<256x128xf32, #tpu.memory_space<vmem>>, vector<256x128xf32>
      %c0_12 = arith.constant 0 : index
      %c0_13 = arith.constant 0 : index
      %13 = vector.load %arg4[%c0_12, %c0_13] : memref<1x128xf32, #tpu.memory_space<vmem>>, vector<1x128xf32>
      %14 = vector.broadcast %13 : vector<1x128xf32> to vector<256x128xf32>
      %15 = arith.addf %12, %14 : vector<256x128xf32>
      %c0_14 = arith.constant 0 : index
      %c0_15 = arith.constant 0 : index
      %16 = vector.load %arg5[%c0_14, %c0_15] : memref<256x128xf32, #tpu.memory_space<vmem>>, vector<256x128xf32>
      tpu.vector_store %arg5[%c0_14, %c0_15], %15 {strides = array<i32>} : memref<256x128xf32, #tpu.memory_space<vmem>>, vector<256x128xf32>,
    } else {
    }
    return
  }
  func.func @transform_0(%arg0: i32, %arg1: i32) -> (i32, i32) {
    %c0_i32 = arith.constant 0 : i32
    return %arg0, %arg1 : i32, i32
  }
  func.func @transform_1(%arg0: i32, %arg1: i32) -> (i32, i32) {
    %c0_i32 = arith.constant 0 : i32
    %c0_i32_0 = arith.constant 0 : i32
    return %arg1, %c0_i32 : i32, i32
  }
  func.func @transform_2(%arg0: i32, %arg1: i32) -> (i32, i32) {
    %c0_i32 = arith.constant 0 : i32
    %c0_i32_0 = arith.constant 0 : i32
    %c0_i32_1 = arith.constant 0 : i32
    return %c0_i32, %c0_i32_0 : i32, i32
  }
  func.func @transform_3(%arg0: i32, %arg1: i32) -> (i32, i32) {
    %c0_i32 = arith.constant 0 : i32
    %c0_i32_0 = arith.constant 0 : i32
    return %arg0, %c0_i32 : i32, i32
  }
}

</mosaic_0001>

<llo_original>
// kernel: sgc_forward.3
$region0: #{sgc_forward.3}
  #allocation0 [shape = 'u32[]', space=smem, size = 0x4, offset = 0x4, fixed_abs, tag = 'smem constant byte address 0x4 - core index']
  #allocation1 [shape = 'u32[72,128]{1,0:T(1,128)}', space=vmem, size = 0x9000, scoped, tag = 'internal scratch']
  #allocation2 [shape = 'f32[256,128]{1,0:T(8,128)}', space=vmem, size = 0x20000, scoped, tag = 'scratch operand']
  %s0 = inlined_call_operand.vmem [shape: bf16[256,128], index: 0, kind: input, shape index: {}]
  %s1 = inlined_call_operand.vmem [shape: bf16[128,128], index: 1, kind: input, shape index: {}]
  %s2 = inlined_call_operand.vmem [shape: bf16[256,128], index: 2, kind: output, shape index: {}]
  %s3 = sld [smem:[#allocation0]]
  $region26: #{sgc_forward.3} parent=0
    _
  %s5 = ssub.s32 1, %s3
  %s6 = scalar_select 0, %s5, %s3
  // Predicated region
  $region2: #{sgc_forward.3} parent=0 // pred_check
    _
  $region3: #{sgc_forward.3} parent=0 // pred_check_branch
    %8 = sbr.rel (0) target = $region5
  $region4: #{sgc_forward.3} parent=0 // pred_region
    _
  $region5: #{sgc_forward.3} parent=0 // pred_fallthru
    _
  // Predicated region
  $region6: #{sgc_forward.3} parent=0 // pred_check
    _
  $region7: #{sgc_forward.3} parent=0 // pred_check_branch
    %10 = sbr.rel (0) target = $region9
  $region8: #{sgc_forward.3} parent=0 // pred_region
    _
  $region9: #{sgc_forward.3} parent=0 // pred_fallthru
    _
  %p11 = scmp.eq.s32.totalorder 0, 0
  // Predicated region
  $region10: #{sgc_forward.3} parent=0 // pred_check
    %p12 = pneg %p11
  $region11: #{sgc_forward.3} parent=0 // pred_check_branch
    %14 = sbr.rel (%p12) target = $region13
  $region12: #{sgc_forward.3} parent=0 // pred_region
    %15 = vst [vmem:[#allocation2] sm:$0xff] 0.0
    %16 = vst [vmem:[#allocation2 + $0x8] sm:$0xff] 0.0
    %17 = vst [vmem:[#allocation2 + $0x10] sm:$0xff] 0.0
    %18 = vst [vmem:[#allocation2 + $0x18] sm:$0xff] 0.0
    %19 = vst [vmem:[#allocation2 + $0x20] sm:$0xff] 0.0
    %20 = vst [vmem:[#allocation2 + $0x28] sm:$0xff] 0.0
    %21 = vst [vmem:[#allocation2 + $0x30] sm:$0xff] 0.0
    %22 = vst [vmem:[#allocation2 + $0x38] sm:$0xff] 0.0
    %23 = vst [vmem:[#allocation2 + $0x40] sm:$0xff] 0.0
    %24 = vst [vmem:[#allocation2 + $0x48] sm:$0xff] 0.0
    %25 = vst [vmem:[#allocation2 + $0x50] sm:$0xff] 0.0
    %26 = vst [vmem:[#allocation2 + $0x58] sm:$0xff] 0.0
    %27 = vst [vmem:[#allocation2 + $0x60] sm:$0xff] 0.0
    %28 = vst [vmem:[#allocation2 + $0x68] sm:$0xff] 0.0
    %29 = vst [vmem:[#allocation2 + $0x70] sm:$0xff] 0.0
    %30 = vst [vmem:[#allocation2 + $0x78] sm:$0xff] 0.0
    %31 = vst [vmem:[#allocation2 + $0x80] sm:$0xff] 0.0
    %32 = vst [vmem:[#allocation2 + $0x88] sm:$0xff] 0.0
    %33 = vst [vmem:[#allocation2 + $0x90] sm:$0xff] 0.0
    %34 = vst [vmem:[#allocation2 + $0x98] sm:$0xff] 0.0
    %35 = vst [vmem:[#allocation2 + $0xa0] sm:$0xff] 0.0
    %36 = vst [vmem:[#allocation2 + $0xa8] sm:$0xff] 0.0
    %37 = vst [vmem:[#allocation2 + $0xb0] sm:$0xff] 0.0
    %38 = vst [vmem:[#allocation2 + $0xb8] sm:$0xff] 0.0
    %39 = vst [vmem:[#allocation2 + $0xc0] sm:$0xff] 0.0
    %40 = vst [vmem:[#allocation2 + $0xc8] sm:$0xff] 0.0
    %41 = vst [vmem:[#allocation2 + $0xd0] sm:$0xff] 0.0
    %42 = vst [vmem:[#allocation2 + $0xd8] sm:$0xff] 0.0
    %43 = vst [vmem:[#allocation2 + $0xe0] sm:$0xff] 0.0
    %44 = vst [vmem:[#allocation2 + $0xe8] sm:$0xff] 0.0
    %45 = vst [vmem:[#allocation2 + $0xf0] sm:$0xff] 0.0
    %46 = vst [vmem:[#allocation2 + $0xf8] sm:$0xff] 0.0
  $region13: #{sgc_forward.3} parent=0 // pred_fallthru
    _
  %v47 = vld [vmem:[#allocation2] sm:$0xff]
  %v48 = vld [vmem:[#allocation2 + $0x8] sm:$0xff]
  %v49 = vld [vmem:[#allocation2 + $0x10] sm:$0xff]
  %v50 = vld [vmem:[#allocation2 + $0x18] sm:$0xff]
  %v51 = vld [vmem:[#allocation2 + $0x20] sm:$0xff]
  %v52 = vld [vmem:[#allocation2 + $0x28] sm:$0xff]
  %v53 = vld [vmem:[#allocation2 + $0x30] sm:$0xff]
  %v54 = vld [vmem:[#allocation2 + $0x38] sm:$0xff]
  %v55 = vld [vmem:[#allocation2 + $0x40] sm:$0xff]
  %v56 = vld [vmem:[#allocation2 + $0x48] sm:$0xff]
  %v57 = vld [vmem:[#allocation2 + $0x50] sm:$0xff]
  %v58 = vld [vmem:[#allocation2 + $0x58] sm:$0xff]
  %v59 = vld [vmem:[#allocation2 + $0x60] sm:$0xff]
  %v60 = vld [vmem:[#allocation2 + $0x68] sm:$0xff]
  %v61 = vld [vmem:[#allocation2 + $0x70] sm:$0xff]
  %v62 = vld [vmem:[#allocation2 + $0x78] sm:$0xff]
  %v63 = vld [vmem:[#allocation2 + $0x80] sm:$0xff]
  %v64 = vld [vmem:[#allocation2 + $0x88] sm:$0xff]
  %v65 = vld [vmem:[#allocation2 + $0x90] sm:$0xff]
  %v66 = vld [vmem:[#allocation2 + $0x98] sm:$0xff]
  %v67 = vld [vmem:[#allocation2 + $0xa0] sm:$0xff]
  %v68 = vld [vmem:[#allocation2 + $0xa8] sm:$0xff]
  %v69 = vld [vmem:[#allocation2 + $0xb0] sm:$0xff]
  %v70 = vld [vmem:[#allocation2 + $0xb8] sm:$0xff]
  %v71 = vld [vmem:[#allocation2 + $0xc0] sm:$0xff]
  %v72 = vld [vmem:[#allocation2 + $0xc8] sm:$0xff]
  %v73 = vld [vmem:[#allocation2 + $0xd0] sm:$0xff]
  %v74 = vld [vmem:[#allocation2 + $0xd8] sm:$0xff]
  %v75 = vld [vmem:[#allocation2 + $0xe0] sm:$0xff]
  %v76 = vld [vmem:[#allocation2 + $0xe8] sm:$0xff]
  %v77 = vld [vmem:[#allocation2 + $0xf0] sm:$0xff]
  %v78 = vld [vmem:[#allocation2 + $0xf8] sm:$0xff]
  %v79 = vld [vmem:[%s0] sm:$0xf]
  %v80 = vld [vmem:[%s0 + $0x4] sm:$0xf]
  %v81 = vld [vmem:[%s0 + $0x8] sm:$0xf]
  %v82 = vld [vmem:[%s0 + $0xc] sm:$0xf]
  %v83 = vld [vmem:[%s0 + $0x10] sm:$0xf]
  %v84 = vld [vmem:[%s0 + $0x14] sm:$0xf]
  %v85 = vld [vmem:[%s0 + $0x18] sm:$0xf]
  %v86 = vld [vmem:[%s0 + $0x1c] sm:$0xf]
  %v87 = vld [vmem:[%s0 + $0x20] sm:$0xf]
  %v88 = vld [vmem:[%s0 + $0x24] sm:$0xf]
  %v89 = vld [vmem:[%s0 + $0x28] sm:$0xf]
  %v90 = vld [vmem:[%s0 + $0x2c] sm:$0xf]
  %v91 = vld [vmem:[%s0 + $0x30] sm:$0xf]
  %v92 = vld [vmem:[%s0 + $0x34] sm:$0xf]
  %v93 = vld [vmem:[%s0 + $0x38] sm:$0xf]
  %v94 = vld [vmem:[%s0 + $0x3c] sm:$0xf]
  %v95 = vld [vmem:[%s0 + $0x40] sm:$0xf]
  %v96 = vld [vmem:[%s0 + $0x44] sm:$0xf]
  %v97 = vld [vmem:[%s0 + $0x48] sm:$0xf]
  %v98 = vld [vmem:[%s0 + $0x4c] sm:$0xf]
  %v99 = vld [vmem:[%s0 + $0x50] sm:$0xf]
  %v100 = vld [vmem:[%s0 + $0x54] sm:$0xf]
  %v101 = vld [vmem:[%s0 + $0x58] sm:$0xf]
  %v102 = vld [vmem:[%s0 + $0x5c] sm:$0xf]
  %v103 = vld [vmem:[%s0 + $0x60] sm:$0xf]
  %v104 = vld [vmem:[%s0 + $0x64] sm:$0xf]
  %v105 = vld [vmem:[%s0 + $0x68] sm:$0xf]
  %v106 = vld [vmem:[%s0 + $0x6c] sm:$0xf]
  %v107 = vld [vmem:[%s0 + $0x70] sm:$0xf]
  %v108 = vld [vmem:[%s0 + $0x74] sm:$0xf]
  %v109 = vld [vmem:[%s0 + $0x78] sm:$0xf]
  %v110 = vld [vmem:[%s0 + $0x7c] sm:$0xf]
  %v111 = vld [vmem:[%s1] sm:$0xf]
  %v112 = vld [vmem:[%s1 + $0x4] sm:$0xf]
  %v113 = vld [vmem:[%s1 + $0x8] sm:$0xf]
  %v114 = vld [vmem:[%s1 + $0xc] sm:$0xf]
  %v115 = vld [vmem:[%s1 + $0x10] sm:$0xf]
  %v116 = vld [vmem:[%s1 + $0x14] sm:$0xf]
  %v117 = vld [vmem:[%s1 + $0x18] sm:$0xf]
  %v118 = vld [vmem:[%s1 + $0x1c] sm:$0xf]
  %v119 = vld [vmem:[%s1 + $0x20] sm:$0xf]
  %v120 = vld [vmem:[%s1 + $0x24] sm:$0xf]
  %v121 = vld [vmem:[%s1 + $0x28] sm:$0xf]
  %v122 = vld [vmem:[%s1 + $0x2c] sm:$0xf]
  %v123 = vld [vmem:[%s1 + $0x30] sm:$0xf]
  %v124 = vld [vmem:[%s1 + $0x34] sm:$0xf]
  %v125 = vld [vmem:[%s1 + $0x38] sm:$0xf]
  %v126 = vld [vmem:[%s1 + $0x3c] sm:$0xf]
  %v159 = vunpack.c.l.b16 %v79
  %v160 = vunpack.c.l.b16 %v80
  %v161 = vunpack.c.l.b16 %v81
  %v162 = vunpack.c.l.b16 %v82
  %v163 = vunpack.c.l.b16 %v83
  %v164 = vunpack.c.l.b16 %v84
  %v165 = vunpack.c.l.b16 %v85
  %v166 = vunpack.c.l.b16 %v86
  %v167 = vunpack.c.l.b16 %v87
  %v168 = vunpack.c.l.b16 %v88
  %v169 = vunpack.c.l.b16 %v89
  %v170 = vunpack.c.l.b16 %v90
  %v171 = vunpack.c.l.b16 %v91
  %v172 = vunpack.c.l.b16 %v92
  %v173 = vunpack.c.l.b16 %v93
  %v174 = vunpack.c.l.b16 %v94
  %v175 = vunpack.c.l.b16 %v95
  %v176 = vunpack.c.l.b16 %v96
  %v177 = vunpack.c.l.b16 %v97
  %v178 = vunpack.c.l.b16 %v98
  %v179 = vunpack.c.l.b16 %v99
  %v180 = vunpack.c.l.b16 %v100
  %v181 = vunpack.c.l.b16 %v101
  %v182 = vunpack.c.l.b16 %v102
  %v183 = vunpack.c.l.b16 %v103
  %v184 = vunpack.c.l.b16 %v104
  %v185 = vunpack.c.l.b16 %v105
  %v186 = vunpack.c.l.b16 %v106
  %v187 = vunpack.c.l.b16 %v107
  %v188 = vunpack.c.l.b16 %v108
  %v189 = vunpack.c.l.b16 %v109
  %v190 = vunpack.c.l.b16 %v110
  %v191 = vpack.c.b16 %v160, %v159
  %v192 = vpack.c.b16 %v162, %v161
  %v193 = vpack.c.b16 %v164, %v163
  %v194 = vpack.c.b16 %v166, %v165
  %v195 = vpack.c.b16 %v168, %v167
  %v196 = vpack.c.b16 %v170, %v169
  %v197 = vpack.c.b16 %v172, %v171
  %v198 = vpack.c.b16 %v174, %v173
  %v199 = vpack.c.b16 %v176, %v175
  %v200 = vpack.c.b16 %v178, %v177
  %v201 = vpack.c.b16 %v180, %v179
  %v202 = vpack.c.b16 %v182, %v181
  %v203 = vpack.c.b16 %v184, %v183
  %v204 = vpack.c.b16 %v186, %v185
  %v205 = vpack.c.b16 %v188, %v187
  %v206 = vpack.c.b16 %v190, %v189
  %v239 = vunpack.c.l.b16 %v111
  %v240 = vunpack.c.l.b16 %v112
  %v241 = vunpack.c.l.b16 %v113
  %v242 = vunpack.c.l.b16 %v114
  %v243 = vunpack.c.l.b16 %v115
  %v244 = vunpack.c.l.b16 %v116
  %v245 = vunpack.c.l.b16 %v117
  %v246 = vunpack.c.l.b16 %v118
  %v247 = vunpack.c.l.b16 %v119
  %v248 = vunpack.c.l.b16 %v120
  %v249 = vunpack.c.l.b16 %v121
  %v250 = vunpack.c.l.b16 %v122
  %v251 = vunpack.c.l.b16 %v123
  %v252 = vunpack.c.l.b16 %v124
  %v253 = vunpack.c.l.b16 %v125
  %v254 = vunpack.c.l.b16 %v126
  %v255 = vpack.c.b16 %v240, %v239
  %v256 = vpack.c.b16 %v242, %v241
  %v257 = vpack.c.b16 %v244, %v243
  %v258 = vpack.c.b16 %v246, %v245
  %v259 = vpack.c.b16 %v248, %v247
  %v260 = vpack.c.b16 %v250, %v249
  %v261 = vpack.c.b16 %v252, %v251
  %v262 = vpack.c.b16 %v254, %v253
  %271 = vmatpush.bf16.msra.mxu0 %v262
  %272 = vmatpush.bf16.msra.mxu0 %v261
  %273 = vmatpush.bf16.msra.mxu0 %v260
  %274 = vmatpush.bf16.msra.mxu0 %v259
  %275 = vmatpush.bf16.msra.mxu0 %v258
  %276 = vmatpush.bf16.msra.mxu0 %v257
  %277 = vmatpush.bf16.msra.mxu0 %v256
  %278 = vmatpush.bf16.msra.mxu0 %v255
  %279 = vmatmul.bf16.gmra.mxu0 %v191
  %v280 = vpop.f32.mrf.mxu0
  %v281 = vadd.f32 0.0, %v280
  %v282 = vpop.f32.mrf.mxu0
  %v283 = vadd.f32 0.0, %v282
  %284 = vmatmul.bf16.gmra.mxu0 %v192
  %v285 = vpop.f32.mrf.mxu0
  %v286 = vadd.f32 0.0, %v285
  %v287 = vpop.f32.mrf.mxu0
  %v288 = vadd.f32 0.0, %v287
  %289 = vmatmul.bf16.gmra.mxu0 %v193
  %v290 = vpop.f32.mrf.mxu0
  %v291 = vadd.f32 0.0, %v290
  %v292 = vpop.f32.mrf.mxu0
  %v293 = vadd.f32 0.0, %v292
  %294 = vmatmul.bf16.gmra.mxu0 %v194
  %v295 = vpop.f32.mrf.mxu0
  %v296 = vadd.f32 0.0, %v295
  %v297 = vpop.f32.mrf.mxu0
  %v298 = vadd.f32 0.0, %v297
  %299 = vmatmul.bf16.gmra.mxu0 %v195
  %v300 = vpop.f32.mrf.mxu0
  %v301 = vadd.f32 0.0, %v300
  %v302 = vpop.f32.mrf.mxu0
  %v303 = vadd.f32 0.0, %v302
  %304 = vmatmul.bf16.gmra.mxu0 %v196
  %v305 = vpop.f32.mrf.mxu0
  %v306 = vadd.f32 0.0, %v305
  %v307 = vpop.f32.mrf.mxu0
  %v308 = vadd.f32 0.0, %v307
  %309 = vmatmul.bf16.gmra.mxu0 %v197
  %v310 = vpop.f32.mrf.mxu0
  %v311 = vadd.f32 0.0, %v310
  %v312 = vpop.f32.mrf.mxu0
  %v313 = vadd.f32 0.0, %v312
  %314 = vmatmul.bf16.gmra.mxu0 %v198
  %v315 = vpop.f32.mrf.mxu0
  %v316 = vadd.f32 0.0, %v315
  %v317 = vpop.f32.mrf.mxu0
  %v318 = vadd.f32 0.0, %v317
  %319 = vmatmul.bf16.gmra.mxu0 %v199
  %v320 = vpop.f32.mrf.mxu0
  %v321 = vadd.f32 0.0, %v320
  %v322 = vpop.f32.mrf.mxu0
  %v323 = vadd.f32 0.0, %v322
  %324 = vmatmul.bf16.gmra.mxu0 %v200
  %v325 = vpop.f32.mrf.mxu0
  %v326 = vadd.f32 0.0, %v325
  %v327 = vpop.f32.mrf.mxu0
  %v328 = vadd.f32 0.0, %v327
  %329 = vmatmul.bf16.gmra.mxu0 %v201
  %v330 = vpop.f32.mrf.mxu0
  %v331 = vadd.f32 0.0, %v330
  %v332 = vpop.f32.mrf.mxu0
  %v333 = vadd.f32 0.0, %v332
  %334 = vmatmul.bf16.gmra.mxu0 %v202
  %v335 = vpop.f32.mrf.mxu0
  %v336 = vadd.f32 0.0, %v335
  %v337 = vpop.f32.mrf.mxu0
  %v338 = vadd.f32 0.0, %v337
  %339 = vmatmul.bf16.gmra.mxu0 %v203
  %v340 = vpop.f32.mrf.mxu0
  %v341 = vadd.f32 0.0, %v340
  %v342 = vpop.f32.mrf.mxu0
  %v343 = vadd.f32 0.0, %v342
  %344 = vmatmul.bf16.gmra.mxu0 %v204
  %v345 = vpop.f32.mrf.mxu0
  %v346 = vadd.f32 0.0, %v345
  %v347 = vpop.f32.mrf.mxu0
  %v348 = vadd.f32 0.0, %v347
  %349 = vmatmul.bf16.gmra.mxu0 %v205
  %v350 = vpop.f32.mrf.mxu0
  %v351 = vadd.f32 0.0, %v350
  %v352 = vpop.f32.mrf.mxu0
  %v353 = vadd.f32 0.0, %v352
  %354 = vmatmul.bf16.gmra.mxu0 %v206
  %v355 = vpop.f32.mrf.mxu0
  %v356 = vadd.f32 0.0, %v355
  %v357 = vpop.f32.mrf.mxu0
  %v358 = vadd.f32 0.0, %v357
  %359 = vdwg.mxu0
  %v360 = vadd.f32 %v47, %v281
  %v361 = vadd.f32 %v48, %v283
  %v362 = vadd.f32 %v49, %v286
  %v363 = vadd.f32 %v50, %v288
  %v364 = vadd.f32 %v51, %v291
  %v365 = vadd.f32 %v52, %v293
  %v366 = vadd.f32 %v53, %v296
  %v367 = vadd.f32 %v54, %v298
  %v368 = vadd.f32 %v55, %v301
  %v369 = vadd.f32 %v56, %v303
  %v370 = vadd.f32 %v57, %v306
  %v371 = vadd.f32 %v58, %v308
  %v372 = vadd.f32 %v59, %v311
  %v373 = vadd.f32 %v60, %v313
  %v374 = vadd.f32 %v61, %v316
  %v375 = vadd.f32 %v62, %v318
  %v376 = vadd.f32 %v63, %v321
  %v377 = vadd.f32 %v64, %v323
  %v378 = vadd.f32 %v65, %v326
  %v379 = vadd.f32 %v66, %v328
  %v380 = vadd.f32 %v67, %v331
  %v381 = vadd.f32 %v68, %v333
  %v382 = vadd.f32 %v69, %v336
  %v383 = vadd.f32 %v70, %v338
  %v384 = vadd.f32 %v71, %v341
  %v385 = vadd.f32 %v72, %v343
  %v386 = vadd.f32 %v73, %v346
  %v387 = vadd.f32 %v74, %v348
  %v388 = vadd.f32 %v75, %v351
  %v389 = vadd.f32 %v76, %v353
  %v390 = vadd.f32 %v77, %v356
  %v391 = vadd.f32 %v78, %v358
  %392 = vst [vmem:[#allocation2] sm:$0xff] %v360
  %393 = vst [vmem:[#allocation2 + $0x8] sm:$0xff] %v361
  %394 = vst [vmem:[#allocation2 + $0x10] sm:$0xff] %v362
  %395 = vst [vmem:[#allocation2 + $0x18] sm:$0xff] %v363
  %396 = vst [vmem:[#allocation2 + $0x20] sm:$0xff] %v364
  %397 = vst [vmem:[#allocation2 + $0x28] sm:$0xff] %v365
  %398 = vst [vmem:[#allocation2 + $0x30] sm:$0xff] %v366
  %399 = vst [vmem:[#allocation2 + $0x38] sm:$0xff] %v367
  %400 = vst [vmem:[#allocation2 + $0x40] sm:$0xff] %v368
  %401 = vst [vmem:[#allocation2 + $0x48] sm:$0xff] %v369
  %402 = vst [vmem:[#allocation2 + $0x50] sm:$0xff] %v370
  %403 = vst [vmem:[#allocation2 + $0x58] sm:$0xff] %v371
  %404 = vst [vmem:[#allocation2 + $0x60] sm:$0xff] %v372
  %405 = vst [vmem:[#allocation2 + $0x68] sm:$0xff] %v373
  %406 = vst [vmem:[#allocation2 + $0x70] sm:$0xff] %v374
  %407 = vst [vmem:[#allocation2 + $0x78] sm:$0xff] %v375
  %408 = vst [vmem:[#allocation2 + $0x80] sm:$0xff] %v376
  %409 = vst [vmem:[#allocation2 + $0x88] sm:$0xff] %v377
  %410 = vst [vmem:[#allocation2 + $0x90] sm:$0xff] %v378
  %411 = vst [vmem:[#allocation2 + $0x98] sm:$0xff] %v379
  %412 = vst [vmem:[#allocation2 + $0xa0] sm:$0xff] %v380
  %413 = vst [vmem:[#allocation2 + $0xa8] sm:$0xff] %v381
  %414 = vst [vmem:[#allocation2 + $0xb0] sm:$0xff] %v382
  %415 = vst [vmem:[#allocation2 + $0xb8] sm:$0xff] %v383
  %416 = vst [vmem:[#allocation2 + $0xc0] sm:$0xff] %v384
  %417 = vst [vmem:[#allocation2 + $0xc8] sm:$0xff] %v385
  %418 = vst [vmem:[#allocation2 + $0xd0] sm:$0xff] %v386
  %419 = vst [vmem:[#allocation2 + $0xd8] sm:$0xff] %v387
  %420 = vst [vmem:[#allocation2 + $0xe0] sm:$0xff] %v388
  %421 = vst [vmem:[#allocation2 + $0xe8] sm:$0xff] %v389
  %422 = vst [vmem:[#allocation2 + $0xf0] sm:$0xff] %v390
  %423 = vst [vmem:[#allocation2 + $0xf8] sm:$0xff] %v391
  // Predicated region
  $region14: #{sgc_forward.3} parent=0 // pred_check
    %p424 = pneg %p11
  $region15: #{sgc_forward.3} parent=0 // pred_check_branch
    %426 = sbr.rel (%p424) target = $region17
  $region16: #{sgc_forward.3} parent=0 // pred_region
    %v427 = vld [vmem:[#allocation2] sm:$0xff]
    %v428 = vld [vmem:[#allocation2 + $0x8] sm:$0xff]
    %v429 = vld [vmem:[#allocation2 + $0x10] sm:$0xff]
    %v430 = vld [vmem:[#allocation2 + $0x18] sm:$0xff]
    %v431 = vld [vmem:[#allocation2 + $0x20] sm:$0xff]
    %v432 = vld [vmem:[#allocation2 + $0x28] sm:$0xff]
    %v433 = vld [vmem:[#allocation2 + $0x30] sm:$0xff]
    %v434 = vld [vmem:[#allocation2 + $0x38] sm:$0xff]
    %v435 = vld [vmem:[#allocation2 + $0x40] sm:$0xff]
    %v436 = vld [vmem:[#allocation2 + $0x48] sm:$0xff]
    %v437 = vld [vmem:[#allocation2 + $0x50] sm:$0xff]
    %v438 = vld [vmem:[#allocation2 + $0x58] sm:$0xff]
    %v439 = vld [vmem:[#allocation2 + $0x60] sm:$0xff]
    %v440 = vld [vmem:[#allocation2 + $0x68] sm:$0xff]
    %v441 = vld [vmem:[#allocation2 + $0x70] sm:$0xff]
    %v442 = vld [vmem:[#allocation2 + $0x78] sm:$0xff]
    %v443 = vld [vmem:[#allocation2 + $0x80] sm:$0xff]
    %v444 = vld [vmem:[#allocation2 + $0x88] sm:$0xff]
    %v445 = vld [vmem:[#allocation2 + $0x90] sm:$0xff]
    %v446 = vld [vmem:[#allocation2 + $0x98] sm:$0xff]
    %v447 = vld [vmem:[#allocation2 + $0xa0] sm:$0xff]
    %v448 = vld [vmem:[#allocation2 + $0xa8] sm:$0xff]
    %v449 = vld [vmem:[#allocation2 + $0xb0] sm:$0xff]
    %v450 = vld [vmem:[#allocation2 + $0xb8] sm:$0xff]
    %v451 = vld [vmem:[#allocation2 + $0xc0] sm:$0xff]
    %v452 = vld [vmem:[#allocation2 + $0xc8] sm:$0xff]
    %v453 = vld [vmem:[#allocation2 + $0xd0] sm:$0xff]
    %v454 = vld [vmem:[#allocation2 + $0xd8] sm:$0xff]
    %v455 = vld [vmem:[#allocation2 + $0xe0] sm:$0xff]
    %v456 = vld [vmem:[#allocation2 + $0xe8] sm:$0xff]
    %v457 = vld [vmem:[#allocation2 + $0xf0] sm:$0xff]
    %v458 = vld [vmem:[#allocation2 + $0xf8] sm:$0xff]
    %v459 = vpack.c.bf16 %v427, %v427
    %v460 = vpack.c.bf16 %v428, %v428
    %v461 = vpack.c.bf16 %v429, %v429
    %v462 = vpack.c.bf16 %v430, %v430
    %v463 = vpack.c.bf16 %v431, %v431
    %v464 = vpack.c.bf16 %v432, %v432
    %v465 = vpack.c.bf16 %v433, %v433
    %v466 = vpack.c.bf16 %v434, %v434
    %v467 = vpack.c.bf16 %v435, %v435
    %v468 = vpack.c.bf16 %v436, %v436
    %v469 = vpack.c.bf16 %v437, %v437
    %v470 = vpack.c.bf16 %v438, %v438
    %v471 = vpack.c.bf16 %v439, %v439
    %v472 = vpack.c.bf16 %v440, %v440
    %v473 = vpack.c.bf16 %v441, %v441
    %v474 = vpack.c.bf16 %v442, %v442
    %v475 = vpack.c.bf16 %v443, %v443
    %v476 = vpack.c.bf16 %v444, %v444
    %v477 = vpack.c.bf16 %v445, %v445
    %v478 = vpack.c.bf16 %v446, %v446
    %v479 = vpack.c.bf16 %v447, %v447
    %v480 = vpack.c.bf16 %v448, %v448
    %v481 = vpack.c.bf16 %v449, %v449
    %v482 = vpack.c.bf16 %v450, %v450
    %v483 = vpack.c.bf16 %v451, %v451
    %v484 = vpack.c.bf16 %v452, %v452
    %v485 = vpack.c.bf16 %v453, %v453
    %v486 = vpack.c.bf16 %v454, %v454
    %v487 = vpack.c.bf16 %v455, %v455
    %v488 = vpack.c.bf16 %v456, %v456
    %v489 = vpack.c.bf16 %v457, %v457
    %v490 = vpack.c.bf16 %v458, %v458
    %491 = vst [vmem:[%s2] sm:$0xf] %v459
    %492 = vst [vmem:[%s2 + $0x4] sm:$0xf] %v460
    %493 = vst [vmem:[%s2 + $0x8] sm:$0xf] %v461
    %494 = vst [vmem:[%s2 + $0xc] sm:$0xf] %v462
    %495 = vst [vmem:[%s2 + $0x10] sm:$0xf] %v463
    %496 = vst [vmem:[%s2 + $0x14] sm:$0xf] %v464
    %497 = vst [vmem:[%s2 + $0x18] sm:$0xf] %v465
    %498 = vst [vmem:[%s2 + $0x1c] sm:$0xf] %v466
    %499 = vst [vmem:[%s2 + $0x20] sm:$0xf] %v467
    %500 = vst [vmem:[%s2 + $0x24] sm:$0xf] %v468
    %501 = vst [vmem:[%s2 + $0x28] sm:$0xf] %v469
    %502 = vst [vmem:[%s2 + $0x2c] sm:$0xf] %v470
    %503 = vst [vmem:[%s2 + $0x30] sm:$0xf] %v471
    %504 = vst [vmem:[%s2 + $0x34] sm:$0xf] %v472
    %505 = vst [vmem:[%s2 + $0x38] sm:$0xf] %v473
    %506 = vst [vmem:[%s2 + $0x3c] sm:$0xf] %v474
    %507 = vst [vmem:[%s2 + $0x40] sm:$0xf] %v475
    %508 = vst [vmem:[%s2 + $0x44] sm:$0xf] %v476
    %509 = vst [vmem:[%s2 + $0x48] sm:$0xf] %v477
    %510 = vst [vmem:[%s2 + $0x4c] sm:$0xf] %v478
    %511 = vst [vmem:[%s2 + $0x50] sm:$0xf] %v479
    %512 = vst [vmem:[%s2 + $0x54] sm:$0xf] %v480
    %513 = vst [vmem:[%s2 + $0x58] sm:$0xf] %v481
    %514 = vst [vmem:[%s2 + $0x5c] sm:$0xf] %v482
    %515 = vst [vmem:[%s2 + $0x60] sm:$0xf] %v483
    %516 = vst [vmem:[%s2 + $0x64] sm:$0xf] %v484
    %517 = vst [vmem:[%s2 + $0x68] sm:$0xf] %v485
    %518 = vst [vmem:[%s2 + $0x6c] sm:$0xf] %v486
    %519 = vst [vmem:[%s2 + $0x70] sm:$0xf] %v487
    %520 = vst [vmem:[%s2 + $0x74] sm:$0xf] %v488
    %521 = vst [vmem:[%s2 + $0x78] sm:$0xf] %v489
    %522 = vst [vmem:[%s2 + $0x7c] sm:$0xf] %v490
  $region17: #{sgc_forward.3} parent=0 // pred_fallthru
    _
  // Predicated region
  $region18: #{sgc_forward.3} parent=0 // pred_check
    _
  $region19: #{sgc_forward.3} parent=0 // pred_check_branch
    %524 = sbr.rel (0) target = $region21
  $region20: #{sgc_forward.3} parent=0 // pred_region
    _
  $region21: #{sgc_forward.3} parent=0 // pred_fallthru
    _
  // Predicated region
  $region22: #{sgc_forward.3} parent=0 // pred_check
    _
  $region23: #{sgc_forward.3} parent=0 // pred_check_branch
    %526 = sbr.rel (0) target = $region25
  $region24: #{sgc_forward.3} parent=0 // pred_region
    _
  $region25: #{sgc_forward.3} parent=0 // pred_fallthru
    _

// kernel: sgc_forward.5
$region0: #{sgc_forward.5}
  #allocation0 [shape = 'u32[]', space=smem, size = 0x4, offset = 0x4, fixed_abs, tag = 'smem constant byte address 0x4 - core index']
  #allocation1 [shape = 'u32[72,128]{1,0:T(1,128)}', space=vmem, size = 0x9000, scoped, tag = 'internal scratch']
  #allocation2 [shape = 'f32[256,128]{1,0:T(8,128)}', space=vmem, size = 0x20000, scoped, tag = 'scratch operand']
  %s0 = inlined_call_operand.vmem [shape: bf16[256,256], index: 0, kind: input, shape index: {}]
  %s1 = inlined_call_operand.vmem [shape: bf16[256,128], index: 1, kind: input, shape index: {}]
  %s2 = inlined_call_operand.vmem [shape: f32[1,128], index: 2, kind: input, shape index: {}]
  %s3 = inlined_call_operand.vmem [shape: f32[256,128], index: 3, kind: output, shape index: {}]
  %s4 = sld [smem:[#allocation0]]
  $region30: #{sgc_forward.5} parent=0
    _
  %s6 = ssub.s32 1, %s4
  %s7 = scalar_select 0, %s6, %s4
  // Predicated region
  $region2: #{sgc_forward.5} parent=0 // pred_check
    _
  $region3: #{sgc_forward.5} parent=0 // pred_check_branch
    %9 = sbr.rel (0) target = $region5
  $region4: #{sgc_forward.5} parent=0 // pred_region
    _
  $region5: #{sgc_forward.5} parent=0 // pred_fallthru
    _
  // Predicated region
  $region6: #{sgc_forward.5} parent=0 // pred_check
    _
  $region7: #{sgc_forward.5} parent=0 // pred_check_branch
    %11 = sbr.rel (0) target = $region9
  $region8: #{sgc_forward.5} parent=0 // pred_region
    _
  $region9: #{sgc_forward.5} parent=0 // pred_fallthru
    _
  // Predicated region
  $region10: #{sgc_forward.5} parent=0 // pred_check
    _
  $region11: #{sgc_forward.5} parent=0 // pred_check_branch
    %13 = sbr.rel (0) target = $region13
  $region12: #{sgc_forward.5} parent=0 // pred_region
    _
  $region13: #{sgc_forward.5} parent=0 // pred_fallthru
    _
  %p14 = scmp.eq.s32.totalorder 0, 0
  // Predicated region
  $region14: #{sgc_forward.5} parent=0 // pred_check
    %p15 = pneg %p14
  $region15: #{sgc_forward.5} parent=0 // pred_check_branch
    %17 = sbr.rel (%p15) target = $region17
  $region16: #{sgc_forward.5} parent=0 // pred_region
    %18 = vst [vmem:[#allocation2] sm:$0xff] 0.0
    %19 = vst [vmem:[#allocation2 + $0x8] sm:$0xff] 0.0
    %20 = vst [vmem:[#allocation2 + $0x10] sm:$0xff] 0.0
    %21 = vst [vmem:[#allocation2 + $0x18] sm:$0xff] 0.0
    %22 = vst [vmem:[#allocation2 + $0x20] sm:$0xff] 0.0
    %23 = vst [vmem:[#allocation2 + $0x28] sm:$0xff] 0.0
    %24 = vst [vmem:[#allocation2 + $0x30] sm:$0xff] 0.0
    %25 = vst [vmem:[#allocation2 + $0x38] sm:$0xff] 0.0
    %26 = vst [vmem:[#allocation2 + $0x40] sm:$0xff] 0.0
    %27 = vst [vmem:[#allocation2 + $0x48] sm:$0xff] 0.0
    %28 = vst [vmem:[#allocation2 + $0x50] sm:$0xff] 0.0
    %29 = vst [vmem:[#allocation2 + $0x58] sm:$0xff] 0.0
    %30 = vst [vmem:[#allocation2 + $0x60] sm:$0xff] 0.0
    %31 = vst [vmem:[#allocation2 + $0x68] sm:$0xff] 0.0
    %32 = vst [vmem:[#allocation2 + $0x70] sm:$0xff] 0.0
    %33 = vst [vmem:[#allocation2 + $0x78] sm:$0xff] 0.0
    %34 = vst [vmem:[#allocation2 + $0x80] sm:$0xff] 0.0
    %35 = vst [vmem:[#allocation2 + $0x88] sm:$0xff] 0.0
    %36 = vst [vmem:[#allocation2 + $0x90] sm:$0xff] 0.0
    %37 = vst [vmem:[#allocation2 + $0x98] sm:$0xff] 0.0
    %38 = vst [vmem:[#allocation2 + $0xa0] sm:$0xff] 0.0
    %39 = vst [vmem:[#allocation2 + $0xa8] sm:$0xff] 0.0
    %40 = vst [vmem:[#allocation2 + $0xb0] sm:$0xff] 0.0
    %41 = vst [vmem:[#allocation2 + $0xb8] sm:$0xff] 0.0
    %42 = vst [vmem:[#allocation2 + $0xc0] sm:$0xff] 0.0
    %43 = vst [vmem:[#allocation2 + $0xc8] sm:$0xff] 0.0
    %44 = vst [vmem:[#allocation2 + $0xd0] sm:$0xff] 0.0
    %45 = vst [vmem:[#allocation2 + $0xd8] sm:$0xff] 0.0
    %46 = vst [vmem:[#allocation2 + $0xe0] sm:$0xff] 0.0
    %47 = vst [vmem:[#allocation2 + $0xe8] sm:$0xff] 0.0
    %48 = vst [vmem:[#allocation2 + $0xf0] sm:$0xff] 0.0
    %49 = vst [vmem:[#allocation2 + $0xf8] sm:$0xff] 0.0
  $region17: #{sgc_forward.5} parent=0 // pred_fallthru
    _
  %v50 = vld [vmem:[#allocation2] sm:$0xff]
  %v51 = vld [vmem:[#allocation2 + $0x8] sm:$0xff]
  %v52 = vld [vmem:[#allocation2 + $0x10] sm:$0xff]
  %v53 = vld [vmem:[#allocation2 + $0x18] sm:$0xff]
  %v54 = vld [vmem:[#allocation2 + $0x20] sm:$0xff]
  %v55 = vld [vmem:[#allocation2 + $0x28] sm:$0xff]
  %v56 = vld [vmem:[#allocation2 + $0x30] sm:$0xff]
  %v57 = vld [vmem:[#allocation2 + $0x38] sm:$0xff]
  %v58 = vld [vmem:[#allocation2 + $0x40] sm:$0xff]
  %v59 = vld [vmem:[#allocation2 + $0x48] sm:$0xff]
  %v60 = vld [vmem:[#allocation2 + $0x50] sm:$0xff]
  %v61 = vld [vmem:[#allocation2 + $0x58] sm:$0xff]
  %v62 = vld [vmem:[#allocation2 + $0x60] sm:$0xff]
  %v63 = vld [vmem:[#allocation2 + $0x68] sm:$0xff]
  %v64 = vld [vmem:[#allocation2 + $0x70] sm:$0xff]
  %v65 = vld [vmem:[#allocation2 + $0x78] sm:$0xff]
  %v66 = vld [vmem:[#allocation2 + $0x80] sm:$0xff]
  %v67 = vld [vmem:[#allocation2 + $0x88] sm:$0xff]
  %v68 = vld [vmem:[#allocation2 + $0x90] sm:$0xff]
  %v69 = vld [vmem:[#allocation2 + $0x98] sm:$0xff]
  %v70 = vld [vmem:[#allocation2 + $0xa0] sm:$0xff]
  %v71 = vld [vmem:[#allocation2 + $0xa8] sm:$0xff]
  %v72 = vld [vmem:[#allocation2 + $0xb0] sm:$0xff]
  %v73 = vld [vmem:[#allocation2 + $0xb8] sm:$0xff]
  %v74 = vld [vmem:[#allocation2 + $0xc0] sm:$0xff]
  %v75 = vld [vmem:[#allocation2 + $0xc8] sm:$0xff]
  %v76 = vld [vmem:[#allocation2 + $0xd0] sm:$0xff]
  %v77 = vld [vmem:[#allocation2 + $0xd8] sm:$0xff]
  %v78 = vld [vmem:[#allocation2 + $0xe0] sm:$0xff]
  %v79 = vld [vmem:[#allocation2 + $0xe8] sm:$0xff]
  %v80 = vld [vmem:[#allocation2 + $0xf0] sm:$0xff]
  %v81 = vld [vmem:[#allocation2 + $0xf8] sm:$0xff]
  %v82 = vld [vmem:[%s0] sm:$0xff]
  %v83 = vld [vmem:[%s0 + $0x8] sm:$0xff]
  %v84 = vld [vmem:[%s0 + $0x10] sm:$0xff]
  %v85 = vld [vmem:[%s0 + $0x18] sm:$0xff]
  %v86 = vld [vmem:[%s0 + $0x20] sm:$0xff]
  %v87 = vld [vmem:[%s0 + $0x28] sm:$0xff]
  %v88 = vld [vmem:[%s0 + $0x30] sm:$0xff]
  %v89 = vld [vmem:[%s0 + $0x38] sm:$0xff]
  %v90 = vld [vmem:[%s0 + $0x40] sm:$0xff]
  %v91 = vld [vmem:[%s0 + $0x48] sm:$0xff]
  %v92 = vld [vmem:[%s0 + $0x50] sm:$0xff]
  %v93 = vld [vmem:[%s0 + $0x58] sm:$0xff]
  %v94 = vld [vmem:[%s0 + $0x60] sm:$0xff]
  %v95 = vld [vmem:[%s0 + $0x68] sm:$0xff]
  %v96 = vld [vmem:[%s0 + $0x70] sm:$0xff]
  %v97 = vld [vmem:[%s0 + $0x78] sm:$0xff]
  %v98 = vld [vmem:[%s0 + $0x80] sm:$0xff]
  %v99 = vld [vmem:[%s0 + $0x88] sm:$0xff]
  %v100 = vld [vmem:[%s0 + $0x90] sm:$0xff]
  %v101 = vld [vmem:[%s0 + $0x98] sm:$0xff]
  %v102 = vld [vmem:[%s0 + $0xa0] sm:$0xff]
  %v103 = vld [vmem:[%s0 + $0xa8] sm:$0xff]
  %v104 = vld [vmem:[%s0 + $0xb0] sm:$0xff]
  %v105 = vld [vmem:[%s0 + $0xb8] sm:$0xff]
  %v106 = vld [vmem:[%s0 + $0xc0] sm:$0xff]
  %v107 = vld [vmem:[%s0 + $0xc8] sm:$0xff]
  %v108 = vld [vmem:[%s0 + $0xd0] sm:$0xff]
  %v109 = vld [vmem:[%s0 + $0xd8] sm:$0xff]
  %v110 = vld [vmem:[%s0 + $0xe0] sm:$0xff]
  %v111 = vld [vmem:[%s0 + $0xe8] sm:$0xff]
  %v112 = vld [vmem:[%s0 + $0xf0] sm:$0xff]
  %v113 = vld [vmem:[%s0 + $0xf8] sm:$0xff]
  %v114 = vld [vmem:[%s1] sm:$0xf]
  %v115 = vld [vmem:[%s1 + $0x4] sm:$0xf]
  %v116 = vld [vmem:[%s1 + $0x8] sm:$0xf]
  %v117 = vld [vmem:[%s1 + $0xc] sm:$0xf]
  %v118 = vld [vmem:[%s1 + $0x10] sm:$0xf]
  %v119 = vld [vmem:[%s1 + $0x14] sm:$0xf]
  %v120 = vld [vmem:[%s1 + $0x18] sm:$0xf]
  %v121 = vld [vmem:[%s1 + $0x1c] sm:$0xf]
  %v122 = vld [vmem:[%s1 + $0x20] sm:$0xf]
  %v123 = vld [vmem:[%s1 + $0x24] sm:$0xf]
  %v124 = vld [vmem:[%s1 + $0x28] sm:$0xf]
  %v125 = vld [vmem:[%s1 + $0x2c] sm:$0xf]
  %v126 = vld [vmem:[%s1 + $0x30] sm:$0xf]
  %v127 = vld [vmem:[%s1 + $0x34] sm:$0xf]
  %v128 = vld [vmem:[%s1 + $0x38] sm:$0xf]
  %v129 = vld [vmem:[%s1 + $0x3c] sm:$0xf]
  %v130 = vld [vmem:[%s1 + $0x40] sm:$0xf]
  %v131 = vld [vmem:[%s1 + $0x44] sm:$0xf]
  %v132 = vld [vmem:[%s1 + $0x48] sm:$0xf]
  %v133 = vld [vmem:[%s1 + $0x4c] sm:$0xf]
  %v134 = vld [vmem:[%s1 + $0x50] sm:$0xf]
  %v135 = vld [vmem:[%s1 + $0x54] sm:$0xf]
  %v136 = vld [vmem:[%s1 + $0x58] sm:$0xf]
  %v137 = vld [vmem:[%s1 + $0x5c] sm:$0xf]
  %v138 = vld [vmem:[%s1 + $0x60] sm:$0xf]
  %v139 = vld [vmem:[%s1 + $0x64] sm:$0xf]
  %v140 = vld [vmem:[%s1 + $0x68] sm:$0xf]
  %v141 = vld [vmem:[%s1 + $0x6c] sm:$0xf]
  %v142 = vld [vmem:[%s1 + $0x70] sm:$0xf]
  %v143 = vld [vmem:[%s1 + $0x74] sm:$0xf]
  %v144 = vld [vmem:[%s1 + $0x78] sm:$0xf]
  %v145 = vld [vmem:[%s1 + $0x7c] sm:$0xf]
  %v178 = vunpack.c.l.b16 %v82
  %v179 = vunpack.c.h.b16 %v82
  %v180 = vunpack.c.l.b16 %v83
  %v181 = vunpack.c.h.b16 %v83
  %v182 = vunpack.c.l.b16 %v84
  %v183 = vunpack.c.h.b16 %v84
  %v184 = vunpack.c.l.b16 %v85
  %v185 = vunpack.c.h.b16 %v85
  %v186 = vunpack.c.l.b16 %v86
  %v187 = vunpack.c.h.b16 %v86
  %v188 = vunpack.c.l.b16 %v87
  %v189 = vunpack.c.h.b16 %v87
  %v190 = vunpack.c.l.b16 %v88
  %v191 = vunpack.c.h.b16 %v88
  %v192 = vunpack.c.l.b16 %v89
  %v193 = vunpack.c.h.b16 %v89
  %v194 = vunpack.c.l.b16 %v90
  %v195 = vunpack.c.h.b16 %v90
  %v196 = vunpack.c.l.b16 %v91
  %v197 = vunpack.c.h.b16 %v91
  %v198 = vunpack.c.l.b16 %v92
  %v199 = vunpack.c.h.b16 %v92
  %v200 = vunpack.c.l.b16 %v93
  %v201 = vunpack.c.h.b16 %v93
  %v202 = vunpack.c.l.b16 %v94
  %v203 = vunpack.c.h.b16 %v94
  %v204 = vunpack.c.l.b16 %v95
  %v205 = vunpack.c.h.b16 %v95
  %v206 = vunpack.c.l.b16 %v96
  %v207 = vunpack.c.h.b16 %v96
  %v208 = vunpack.c.l.b16 %v97
  %v209 = vunpack.c.h.b16 %v97
  %v210 = vunpack.c.l.b16 %v98
  %v211 = vunpack.c.h.b16 %v98
  %v212 = vunpack.c.l.b16 %v99
  %v213 = vunpack.c.h.b16 %v99
  %v214 = vunpack.c.l.b16 %v100
  %v215 = vunpack.c.h.b16 %v100
  %v216 = vunpack.c.l.b16 %v101
  %v217 = vunpack.c.h.b16 %v101
  %v218 = vunpack.c.l.b16 %v102
  %v219 = vunpack.c.h.b16 %v102
  %v220 = vunpack.c.l.b16 %v103
  %v221 = vunpack.c.h.b16 %v103
  %v222 = vunpack.c.l.b16 %v104
  %v223 = vunpack.c.h.b16 %v104
  %v224 = vunpack.c.l.b16 %v105
  %v225 = vunpack.c.h.b16 %v105
  %v226 = vunpack.c.l.b16 %v106
  %v227 = vunpack.c.h.b16 %v106
  %v228 = vunpack.c.l.b16 %v107
  %v229 = vunpack.c.h.b16 %v107
  %v230 = vunpack.c.l.b16 %v108
  %v231 = vunpack.c.h.b16 %v108
  %v232 = vunpack.c.l.b16 %v109
  %v233 = vunpack.c.h.b16 %v109
  %v234 = vunpack.c.l.b16 %v110
  %v235 = vunpack.c.h.b16 %v110
  %v236 = vunpack.c.l.b16 %v111
  %v237 = vunpack.c.h.b16 %v111
  %v238 = vunpack.c.l.b16 %v112
  %v239 = vunpack.c.h.b16 %v112
  %v240 = vunpack.c.l.b16 %v113
  %v241 = vunpack.c.h.b16 %v113
  %v242 = vpack.c.b16 %v180, %v178
  %v243 = vpack.c.b16 %v181, %v179
  %v244 = vpack.c.b16 %v184, %v182
  %v245 = vpack.c.b16 %v185, %v183
  %v246 = vpack.c.b16 %v188, %v186
  %v247 = vpack.c.b16 %v189, %v187
  %v248 = vpack.c.b16 %v192, %v190
  %v249 = vpack.c.b16 %v193, %v191
  %v250 = vpack.c.b16 %v196, %v194
  %v251 = vpack.c.b16 %v197, %v195
  %v252 = vpack.c.b16 %v200, %v198
  %v253 = vpack.c.b16 %v201, %v199
  %v254 = vpack.c.b16 %v204, %v202
  %v255 = vpack.c.b16 %v205, %v203
  %v256 = vpack.c.b16 %v208, %v206
  %v257 = vpack.c.b16 %v209, %v207
  %v258 = vpack.c.b16 %v212, %v210
  %v259 = vpack.c.b16 %v213, %v211
  %v260 = vpack.c.b16 %v216, %v214
  %v261 = vpack.c.b16 %v217, %v215
  %v262 = vpack.c.b16 %v220, %v218
  %v263 = vpack.c.b16 %v221, %v219
  %v264 = vpack.c.b16 %v224, %v222
  %v265 = vpack.c.b16 %v225, %v223
  %v266 = vpack.c.b16 %v228, %v226
  %v267 = vpack.c.b16 %v229, %v227
  %v268 = vpack.c.b16 %v232, %v230
  %v269 = vpack.c.b16 %v233, %v231
  %v270 = vpack.c.b16 %v236, %v234
  %v271 = vpack.c.b16 %v237, %v235
  %v272 = vpack.c.b16 %v240, %v238
  %v273 = vpack.c.b16 %v241, %v239
  %v338 = vunpack.c.l.b16 %v114
  %v339 = vunpack.c.l.b16 %v115
  %v340 = vunpack.c.l.b16 %v116
  %v341 = vunpack.c.l.b16 %v117
  %v342 = vunpack.c.l.b16 %v118
  %v343 = vunpack.c.l.b16 %v119
  %v344 = vunpack.c.l.b16 %v120
  %v345 = vunpack.c.l.b16 %v121
  %v346 = vunpack.c.l.b16 %v122
  %v347 = vunpack.c.l.b16 %v123
  %v348 = vunpack.c.l.b16 %v124
  %v349 = vunpack.c.l.b16 %v125
  %v350 = vunpack.c.l.b16 %v126
  %v351 = vunpack.c.l.b16 %v127
  %v352 = vunpack.c.l.b16 %v128
  %v353 = vunpack.c.l.b16 %v129
  %v354 = vunpack.c.l.b16 %v130
  %v355 = vunpack.c.l.b16 %v131
  %v356 = vunpack.c.l.b16 %v132
  %v357 = vunpack.c.l.b16 %v133
  %v358 = vunpack.c.l.b16 %v134
  %v359 = vunpack.c.l.b16 %v135
  %v360 = vunpack.c.l.b16 %v136
  %v361 = vunpack.c.l.b16 %v137
  %v362 = vunpack.c.l.b16 %v138
  %v363 = vunpack.c.l.b16 %v139
  %v364 = vunpack.c.l.b16 %v140
  %v365 = vunpack.c.l.b16 %v141
  %v366 = vunpack.c.l.b16 %v142
  %v367 = vunpack.c.l.b16 %v143
  %v368 = vunpack.c.l.b16 %v144
  %v369 = vunpack.c.l.b16 %v145
  %v370 = vpack.c.b16 %v339, %v338
  %v371 = vpack.c.b16 %v341, %v340
  %v372 = vpack.c.b16 %v343, %v342
  %v373 = vpack.c.b16 %v345, %v344
  %v374 = vpack.c.b16 %v347, %v346
  %v375 = vpack.c.b16 %v349, %v348
  %v376 = vpack.c.b16 %v351, %v350
  %v377 = vpack.c.b16 %v353, %v352
  %v378 = vpack.c.b16 %v355, %v354
  %v379 = vpack.c.b16 %v357, %v356
  %v380 = vpack.c.b16 %v359, %v358
  %v381 = vpack.c.b16 %v361, %v360
  %v382 = vpack.c.b16 %v363, %v362
  %v383 = vpack.c.b16 %v365, %v364
  %v384 = vpack.c.b16 %v367, %v366
  %v385 = vpack.c.b16 %v369, %v368
  %402 = vmatpush.bf16.msra.mxu0 %v377
  %403 = vmatpush.bf16.msra.mxu0 %v376
  %404 = vmatpush.bf16.msra.mxu0 %v375
  %405 = vmatpush.bf16.msra.mxu0 %v374
  %406 = vmatpush.bf16.msra.mxu0 %v373
  %407 = vmatpush.bf16.msra.mxu0 %v372
  %408 = vmatpush.bf16.msra.mxu0 %v371
  %409 = vmatpush.bf16.msra.mxu0 %v370
  %410 = vmatmul.bf16.gmra.mxu0 %v242
  %v411 = vpop.f32.mrf.mxu0
  %v412 = vadd.f32 0.0, %v411
  %v413 = vpop.f32.mrf.mxu0
  %v414 = vadd.f32 0.0, %v413
  %415 = vmatmul.bf16.gmra.mxu0 %v244
  %v416 = vpop.f32.mrf.mxu0
  %v417 = vadd.f32 0.0, %v416
  %v418 = vpop.f32.mrf.mxu0
  %v419 = vadd.f32 0.0, %v418
  %420 = vmatmul.bf16.gmra.mxu0 %v246
  %v421 = vpop.f32.mrf.mxu0
  %v422 = vadd.f32 0.0, %v421
  %v423 = vpop.f32.mrf.mxu0
  %v424 = vadd.f32 0.0, %v423
  %425 = vmatmul.bf16.gmra.mxu0 %v248
  %v426 = vpop.f32.mrf.mxu0
  %v427 = vadd.f32 0.0, %v426
  %v428 = vpop.f32.mrf.mxu0
  %v429 = vadd.f32 0.0, %v428
  %430 = vmatmul.bf16.gmra.mxu0 %v250
  %v431 = vpop.f32.mrf.mxu0
  %v432 = vadd.f32 0.0, %v431
  %v433 = vpop.f32.mrf.mxu0
  %v434 = vadd.f32 0.0, %v433
  %435 = vmatmul.bf16.gmra.mxu0 %v252
  %v436 = vpop.f32.mrf.mxu0
  %v437 = vadd.f32 0.0, %v436
  %v438 = vpop.f32.mrf.mxu0
  %v439 = vadd.f32 0.0, %v438
  %440 = vmatmul.bf16.gmra.mxu0 %v254
  %v441 = vpop.f32.mrf.mxu0
  %v442 = vadd.f32 0.0, %v441
  %v443 = vpop.f32.mrf.mxu0
  %v444 = vadd.f32 0.0, %v443
  %445 = vmatmul.bf16.gmra.mxu0 %v256
  %v446 = vpop.f32.mrf.mxu0
  %v447 = vadd.f32 0.0, %v446
  %v448 = vpop.f32.mrf.mxu0
  %v449 = vadd.f32 0.0, %v448
  %450 = vmatmul.bf16.gmra.mxu0 %v258
  %v451 = vpop.f32.mrf.mxu0
  %v452 = vadd.f32 0.0, %v451
  %v453 = vpop.f32.mrf.mxu0
  %v454 = vadd.f32 0.0, %v453
  %455 = vmatmul.bf16.gmra.mxu0 %v260
  %v456 = vpop.f32.mrf.mxu0
  %v457 = vadd.f32 0.0, %v456
  %v458 = vpop.f32.mrf.mxu0
  %v459 = vadd.f32 0.0, %v458
  %460 = vmatmul.bf16.gmra.mxu0 %v262
  %v461 = vpop.f32.mrf.mxu0
  %v462 = vadd.f32 0.0, %v461
  %v463 = vpop.f32.mrf.mxu0
  %v464 = vadd.f32 0.0, %v463
  %465 = vmatmul.bf16.gmra.mxu0 %v264
  %v466 = vpop.f32.mrf.mxu0
  %v467 = vadd.f32 0.0, %v466
  %v468 = vpop.f32.mrf.mxu0
  %v469 = vadd.f32 0.0, %v468
  %470 = vmatmul.bf16.gmra.mxu0 %v266
  %v471 = vpop.f32.mrf.mxu0
  %v472 = vadd.f32 0.0, %v471
  %v473 = vpop.f32.mrf.mxu0
  %v474 = vadd.f32 0.0, %v473
  %475 = vmatmul.bf16.gmra.mxu0 %v268
  %v476 = vpop.f32.mrf.mxu0
  %v477 = vadd.f32 0.0, %v476
  %v478 = vpop.f32.mrf.mxu0
  %v479 = vadd.f32 0.0, %v478
  %480 = vmatmul.bf16.gmra.mxu0 %v270
  %v481 = vpop.f32.mrf.mxu0
  %v482 = vadd.f32 0.0, %v481
  %v483 = vpop.f32.mrf.mxu0
  %v484 = vadd.f32 0.0, %v483
  %485 = vmatmul.bf16.gmra.mxu0 %v272
  %v486 = vpop.f32.mrf.mxu0
  %v487 = vadd.f32 0.0, %v486
  %v488 = vpop.f32.mrf.mxu0
  %v489 = vadd.f32 0.0, %v488
  %490 = vdwg.mxu0
  %491 = vmatpush.bf16.msra.mxu0 %v385
  %492 = vmatpush.bf16.msra.mxu0 %v384
  %493 = vmatpush.bf16.msra.mxu0 %v383
  %494 = vmatpush.bf16.msra.mxu0 %v382
  %495 = vmatpush.bf16.msra.mxu0 %v381
  %496 = vmatpush.bf16.msra.mxu0 %v380
  %497 = vmatpush.bf16.msra.mxu0 %v379
  %498 = vmatpush.bf16.msra.mxu0 %v378
  %499 = vmatmul.bf16.gmra.mxu0 %v243
  %v500 = vpop.f32.mrf.mxu0
  %v501 = vadd.f32 %v412, %v500
  %v502 = vpop.f32.mrf.mxu0
  %v503 = vadd.f32 %v414, %v502
  %504 = vmatmul.bf16.gmra.mxu0 %v245
  %v505 = vpop.f32.mrf.mxu0
  %v506 = vadd.f32 %v417, %v505
  %v507 = vpop.f32.mrf.mxu0
  %v508 = vadd.f32 %v419, %v507
  %509 = vmatmul.bf16.gmra.mxu0 %v247
  %v510 = vpop.f32.mrf.mxu0
  %v511 = vadd.f32 %v422, %v510
  %v512 = vpop.f32.mrf.mxu0
  %v513 = vadd.f32 %v424, %v512
  %514 = vmatmul.bf16.gmra.mxu0 %v249
  %v515 = vpop.f32.mrf.mxu0
  %v516 = vadd.f32 %v427, %v515
  %v517 = vpop.f32.mrf.mxu0
  %v518 = vadd.f32 %v429, %v517
  %519 = vmatmul.bf16.gmra.mxu0 %v251
  %v520 = vpop.f32.mrf.mxu0
  %v521 = vadd.f32 %v432, %v520
  %v522 = vpop.f32.mrf.mxu0
  %v523 = vadd.f32 %v434, %v522
  %524 = vmatmul.bf16.gmra.mxu0 %v253
  %v525 = vpop.f32.mrf.mxu0
  %v526 = vadd.f32 %v437, %v525
  %v527 = vpop.f32.mrf.mxu0
  %v528 = vadd.f32 %v439, %v527
  %529 = vmatmul.bf16.gmra.mxu0 %v255
  %v530 = vpop.f32.mrf.mxu0
  %v531 = vadd.f32 %v442, %v530
  %v532 = vpop.f32.mrf.mxu0
  %v533 = vadd.f32 %v444, %v532
  %534 = vmatmul.bf16.gmra.mxu0 %v257
  %v535 = vpop.f32.mrf.mxu0
  %v536 = vadd.f32 %v447, %v535
  %v537 = vpop.f32.mrf.mxu0
  %v538 = vadd.f32 %v449, %v537
  %539 = vmatmul.bf16.gmra.mxu0 %v259
  %v540 = vpop.f32.mrf.mxu0
  %v541 = vadd.f32 %v452, %v540
  %v542 = vpop.f32.mrf.mxu0
  %v543 = vadd.f32 %v454, %v542
  %544 = vmatmul.bf16.gmra.mxu0 %v261
  %v545 = vpop.f32.mrf.mxu0
  %v546 = vadd.f32 %v457, %v545
  %v547 = vpop.f32.mrf.mxu0
  %v548 = vadd.f32 %v459, %v547
  %549 = vmatmul.bf16.gmra.mxu0 %v263
  %v550 = vpop.f32.mrf.mxu0
  %v551 = vadd.f32 %v462, %v550
  %v552 = vpop.f32.mrf.mxu0
  %v553 = vadd.f32 %v464, %v552
  %554 = vmatmul.bf16.gmra.mxu0 %v265
  %v555 = vpop.f32.mrf.mxu0
  %v556 = vadd.f32 %v467, %v555
  %v557 = vpop.f32.mrf.mxu0
  %v558 = vadd.f32 %v469, %v557
  %559 = vmatmul.bf16.gmra.mxu0 %v267
  %v560 = vpop.f32.mrf.mxu0
  %v561 = vadd.f32 %v472, %v560
  %v562 = vpop.f32.mrf.mxu0
  %v563 = vadd.f32 %v474, %v562
  %564 = vmatmul.bf16.gmra.mxu0 %v269
  %v565 = vpop.f32.mrf.mxu0
  %v566 = vadd.f32 %v477, %v565
  %v567 = vpop.f32.mrf.mxu0
  %v568 = vadd.f32 %v479, %v567
  %569 = vmatmul.bf16.gmra.mxu0 %v271
  %v570 = vpop.f32.mrf.mxu0
  %v571 = vadd.f32 %v482, %v570
  %v572 = vpop.f32.mrf.mxu0
  %v573 = vadd.f32 %v484, %v572
  %574 = vmatmul.bf16.gmra.mxu0 %v273
  %v575 = vpop.f32.mrf.mxu0
  %v576 = vadd.f32 %v487, %v575
  %v577 = vpop.f32.mrf.mxu0
  %v578 = vadd.f32 %v489, %v577
  %579 = vdwg.mxu0
  %v580 = vadd.f32 %v50, %v501
  %v581 = vadd.f32 %v51, %v503
  %v582 = vadd.f32 %v52, %v506
  %v583 = vadd.f32 %v53, %v508
  %v584 = vadd.f32 %v54, %v511
  %v585 = vadd.f32 %v55, %v513
  %v586 = vadd.f32 %v56, %v516
  %v587 = vadd.f32 %v57, %v518
  %v588 = vadd.f32 %v58, %v521
  %v589 = vadd.f32 %v59, %v523
  %v590 = vadd.f32 %v60, %v526
  %v591 = vadd.f32 %v61, %v528
  %v592 = vadd.f32 %v62, %v531
  %v593 = vadd.f32 %v63, %v533
  %v594 = vadd.f32 %v64, %v536
  %v595 = vadd.f32 %v65, %v538
  %v596 = vadd.f32 %v66, %v541
  %v597 = vadd.f32 %v67, %v543
  %v598 = vadd.f32 %v68, %v546
  %v599 = vadd.f32 %v69, %v548
  %v600 = vadd.f32 %v70, %v551
  %v601 = vadd.f32 %v71, %v553
  %v602 = vadd.f32 %v72, %v556
  %v603 = vadd.f32 %v73, %v558
  %v604 = vadd.f32 %v74, %v561
  %v605 = vadd.f32 %v75, %v563
  %v606 = vadd.f32 %v76, %v566
  %v607 = vadd.f32 %v77, %v568
  %v608 = vadd.f32 %v78, %v571
  %v609 = vadd.f32 %v79, %v573
  %v610 = vadd.f32 %v80, %v576
  %v611 = vadd.f32 %v81, %v578
  %612 = vst [vmem:[#allocation2] sm:$0xff] %v580
  %613 = vst [vmem:[#allocation2 + $0x8] sm:$0xff] %v581
  %614 = vst [vmem:[#allocation2 + $0x10] sm:$0xff] %v582
  %615 = vst [vmem:[#allocation2 + $0x18] sm:$0xff] %v583
  %616 = vst [vmem:[#allocation2 + $0x20] sm:$0xff] %v584
  %617 = vst [vmem:[#allocation2 + $0x28] sm:$0xff] %v585
  %618 = vst [vmem:[#allocation2 + $0x30] sm:$0xff] %v586
  %619 = vst [vmem:[#allocation2 + $0x38] sm:$0xff] %v587
  %620 = vst [vmem:[#allocation2 + $0x40] sm:$0xff] %v588
  %621 = vst [vmem:[#allocation2 + $0x48] sm:$0xff] %v589
  %622 = vst [vmem:[#allocation2 + $0x50] sm:$0xff] %v590
  %623 = vst [vmem:[#allocation2 + $0x58] sm:$0xff] %v591
  %624 = vst [vmem:[#allocation2 + $0x60] sm:$0xff] %v592
  %625 = vst [vmem:[#allocation2 + $0x68] sm:$0xff] %v593
  %626 = vst [vmem:[#allocation2 + $0x70] sm:$0xff] %v594
  %627 = vst [vmem:[#allocation2 + $0x78] sm:$0xff] %v595
  %628 = vst [vmem:[#allocation2 + $0x80] sm:$0xff] %v596
  %629 = vst [vmem:[#allocation2 + $0x88] sm:$0xff] %v597
  %630 = vst [vmem:[#allocation2 + $0x90] sm:$0xff] %v598
  %631 = vst [vmem:[#allocation2 + $0x98] sm:$0xff] %v599
  %632 = vst [vmem:[#allocation2 + $0xa0] sm:$0xff] %v600
  %633 = vst [vmem:[#allocation2 + $0xa8] sm:$0xff] %v601
  %634 = vst [vmem:[#allocation2 + $0xb0] sm:$0xff] %v602
  %635 = vst [vmem:[#allocation2 + $0xb8] sm:$0xff] %v603
  %636 = vst [vmem:[#allocation2 + $0xc0] sm:$0xff] %v604
  %637 = vst [vmem:[#allocation2 + $0xc8] sm:$0xff] %v605
  %638 = vst [vmem:[#allocation2 + $0xd0] sm:$0xff] %v606
  %639 = vst [vmem:[#allocation2 + $0xd8] sm:$0xff] %v607
  %640 = vst [vmem:[#allocation2 + $0xe0] sm:$0xff] %v608
  %641 = vst [vmem:[#allocation2 + $0xe8] sm:$0xff] %v609
  %642 = vst [vmem:[#allocation2 + $0xf0] sm:$0xff] %v610
  %643 = vst [vmem:[#allocation2 + $0xf8] sm:$0xff] %v611
  // Predicated region
  $region18: #{sgc_forward.5} parent=0 // pred_check
    %p644 = pneg %p14
  $region19: #{sgc_forward.5} parent=0 // pred_check_branch
    %646 = sbr.rel (%p644) target = $region21
  $region20: #{sgc_forward.5} parent=0 // pred_region
    %v647 = vld [vmem:[#allocation2] sm:$0xff]
    %v648 = vld [vmem:[#allocation2 + $0x8] sm:$0xff]
    %v649 = vld [vmem:[#allocation2 + $0x10] sm:$0xff]
    %v650 = vld [vmem:[#allocation2 + $0x18] sm:$0xff]
    %v651 = vld [vmem:[#allocation2 + $0x20] sm:$0xff]
    %v652 = vld [vmem:[#allocation2 + $0x28] sm:$0xff]
    %v653 = vld [vmem:[#allocation2 + $0x30] sm:$0xff]
    %v654 = vld [vmem:[#allocation2 + $0x38] sm:$0xff]
    %v655 = vld [vmem:[#allocation2 + $0x40] sm:$0xff]
    %v656 = vld [vmem:[#allocation2 + $0x48] sm:$0xff]
    %v657 = vld [vmem:[#allocation2 + $0x50] sm:$0xff]
    %v658 = vld [vmem:[#allocation2 + $0x58] sm:$0xff]
    %v659 = vld [vmem:[#allocation2 + $0x60] sm:$0xff]
    %v660 = vld [vmem:[#allocation2 + $0x68] sm:$0xff]
    %v661 = vld [vmem:[#allocation2 + $0x70] sm:$0xff]
    %v662 = vld [vmem:[#allocation2 + $0x78] sm:$0xff]
    %v663 = vld [vmem:[#allocation2 + $0x80] sm:$0xff]
    %v664 = vld [vmem:[#allocation2 + $0x88] sm:$0xff]
    %v665 = vld [vmem:[#allocation2 + $0x90] sm:$0xff]
    %v666 = vld [vmem:[#allocation2 + $0x98] sm:$0xff]
    %v667 = vld [vmem:[#allocation2 + $0xa0] sm:$0xff]
    %v668 = vld [vmem:[#allocation2 + $0xa8] sm:$0xff]
    %v669 = vld [vmem:[#allocation2 + $0xb0] sm:$0xff]
    %v670 = vld [vmem:[#allocation2 + $0xb8] sm:$0xff]
    %v671 = vld [vmem:[#allocation2 + $0xc0] sm:$0xff]
    %v672 = vld [vmem:[#allocation2 + $0xc8] sm:$0xff]
    %v673 = vld [vmem:[#allocation2 + $0xd0] sm:$0xff]
    %v674 = vld [vmem:[#allocation2 + $0xd8] sm:$0xff]
    %v675 = vld [vmem:[#allocation2 + $0xe0] sm:$0xff]
    %v676 = vld [vmem:[#allocation2 + $0xe8] sm:$0xff]
    %v677 = vld [vmem:[#allocation2 + $0xf0] sm:$0xff]
    %v678 = vld [vmem:[#allocation2 + $0xf8] sm:$0xff]
    %v679 = vld [vmem:[%s2] sm:$0x1]
    %v681 = vperm.slane %v679, 0
    %v683 = vadd.f32 %v647, %v681
    %v684 = vadd.f32 %v648, %v681
    %v685 = vadd.f32 %v649, %v681
    %v686 = vadd.f32 %v650, %v681
    %v687 = vadd.f32 %v651, %v681
    %v688 = vadd.f32 %v652, %v681
    %v689 = vadd.f32 %v653, %v681
    %v690 = vadd.f32 %v654, %v681
    %v691 = vadd.f32 %v655, %v681
    %v692 = vadd.f32 %v656, %v681
    %v693 = vadd.f32 %v657, %v681
    %v694 = vadd.f32 %v658, %v681
    %v695 = vadd.f32 %v659, %v681
    %v696 = vadd.f32 %v660, %v681
    %v697 = vadd.f32 %v661, %v681
    %v698 = vadd.f32 %v662, %v681
    %v699 = vadd.f32 %v663, %v681
    %v700 = vadd.f32 %v664, %v681
    %v701 = vadd.f32 %v665, %v681
    %v702 = vadd.f32 %v666, %v681
    %v703 = vadd.f32 %v667, %v681
    %v704 = vadd.f32 %v668, %v681
    %v705 = vadd.f32 %v669, %v681
    %v706 = vadd.f32 %v670, %v681
    %v707 = vadd.f32 %v671, %v681
    %v708 = vadd.f32 %v672, %v681
    %v709 = vadd.f32 %v673, %v681
    %v710 = vadd.f32 %v674, %v681
    %v711 = vadd.f32 %v675, %v681
    %v712 = vadd.f32 %v676, %v681
    %v713 = vadd.f32 %v677, %v681
    %v714 = vadd.f32 %v678, %v681
    %715 = vst [vmem:[%s3] sm:$0xff] %v683
    %716 = vst [vmem:[%s3 + $0x8] sm:$0xff] %v684
    %717 = vst [vmem:[%s3 + $0x10] sm:$0xff] %v685
    %718 = vst [vmem:[%s3 + $0x18] sm:$0xff] %v686
    %719 = vst [vmem:[%s3 + $0x20] sm:$0xff] %v687
    %720 = vst [vmem:[%s3 + $0x28] sm:$0xff] %v688
    %721 = vst [vmem:[%s3 + $0x30] sm:$0xff] %v689
    %722 = vst [vmem:[%s3 + $0x38] sm:$0xff] %v690
    %723 = vst [vmem:[%s3 + $0x40] sm:$0xff] %v691
    %724 = vst [vmem:[%s3 + $0x48] sm:$0xff] %v692
    %725 = vst [vmem:[%s3 + $0x50] sm:$0xff] %v693
    %726 = vst [vmem:[%s3 + $0x58] sm:$0xff] %v694
    %727 = vst [vmem:[%s3 + $0x60] sm:$0xff] %v695
    %728 = vst [vmem:[%s3 + $0x68] sm:$0xff] %v696
    %729 = vst [vmem:[%s3 + $0x70] sm:$0xff] %v697
    %730 = vst [vmem:[%s3 + $0x78] sm:$0xff] %v698
    %731 = vst [vmem:[%s3 + $0x80] sm:$0xff] %v699
    %732 = vst [vmem:[%s3 + $0x88] sm:$0xff] %v700
    %733 = vst [vmem:[%s3 + $0x90] sm:$0xff] %v701
    %734 = vst [vmem:[%s3 + $0x98] sm:$0xff] %v702
    %735 = vst [vmem:[%s3 + $0xa0] sm:$0xff] %v703
    %736 = vst [vmem:[%s3 + $0xa8] sm:$0xff] %v704
    %737 = vst [vmem:[%s3 + $0xb0] sm:$0xff] %v705
    %738 = vst [vmem:[%s3 + $0xb8] sm:$0xff] %v706
    %739 = vst [vmem:[%s3 + $0xc0] sm:$0xff] %v707
    %740 = vst [vmem:[%s3 + $0xc8] sm:$0xff] %v708
    %741 = vst [vmem:[%s3 + $0xd0] sm:$0xff] %v709
    %742 = vst [vmem:[%s3 + $0xd8] sm:$0xff] %v710
    %743 = vst [vmem:[%s3 + $0xe0] sm:$0xff] %v711
    %744 = vst [vmem:[%s3 + $0xe8] sm:$0xff] %v712
    %745 = vst [vmem:[%s3 + $0xf0] sm:$0xff] %v713
    %746 = vst [vmem:[%s3 + $0xf8] sm:$0xff] %v714
  $region21: #{sgc_forward.5} parent=0 // pred_fallthru
    _
  // Predicated region
  $region22: #{sgc_forward.5} parent=0 // pred_check
    _
  $region23: #{sgc_forward.5} parent=0 // pred_check_branch
    %748 = sbr.rel (0) target = $region25
  $region24: #{sgc_forward.5} parent=0 // pred_region
    _
  $region25: #{sgc_forward.5} parent=0 // pred_fallthru
    _
  // Predicated region
  $region26: #{sgc_forward.5} parent=0 // pred_check
    _
  $region27: #{sgc_forward.5} parent=0 // pred_check_branch
    %750 = sbr.rel (0) target = $region29
  $region28: #{sgc_forward.5} parent=0 // pred_region
    _
  $region29: #{sgc_forward.5} parent=0 // pred_fallthru
    _

// kernel: sgc_forward.4
$region0: #{sgc_forward.4}
  #allocation0 [shape = 'u32[]', space=smem, size = 0x4, offset = 0x4, fixed_abs, tag = 'smem constant byte address 0x4 - core index']
  #allocation1 [shape = 'u32[72,128]{1,0:T(1,128)}', space=vmem, size = 0x9000, scoped, tag = 'internal scratch']
  #allocation2 [shape = 'f32[256,128]{1,0:T(8,128)}', space=vmem, size = 0x20000, scoped, tag = 'scratch operand']
  %s0 = inlined_call_operand.vmem [shape: bf16[256,256], index: 0, kind: input, shape index: {}]
  %s1 = inlined_call_operand.vmem [shape: bf16[256,128], index: 1, kind: input, shape index: {}]
  %s2 = inlined_call_operand.vmem [shape: bf16[256,128], index: 2, kind: output, shape index: {}]
  %s3 = sld [smem:[#allocation0]]
  $region26: #{sgc_forward.4} parent=0
    _
  %s5 = ssub.s32 1, %s3
  %s6 = scalar_select 0, %s5, %s3
  // Predicated region
  $region2: #{sgc_forward.4} parent=0 // pred_check
    _
  $region3: #{sgc_forward.4} parent=0 // pred_check_branch
    %8 = sbr.rel (0) target = $region5
  $region4: #{sgc_forward.4} parent=0 // pred_region
    _
  $region5: #{sgc_forward.4} parent=0 // pred_fallthru
    _
  // Predicated region
  $region6: #{sgc_forward.4} parent=0 // pred_check
    _
  $region7: #{sgc_forward.4} parent=0 // pred_check_branch
    %10 = sbr.rel (0) target = $region9
  $region8: #{sgc_forward.4} parent=0 // pred_region
    _
  $region9: #{sgc_forward.4} parent=0 // pred_fallthru
    _
  %p11 = scmp.eq.s32.totalorder 0, 0
  // Predicated region
  $region10: #{sgc_forward.4} parent=0 // pred_check
    %p12 = pneg %p11
  $region11: #{sgc_forward.4} parent=0 // pred_check_branch
    %14 = sbr.rel (%p12) target = $region13
  $region12: #{sgc_forward.4} parent=0 // pred_region
    %15 = vst [vmem:[#allocation2] sm:$0xff] 0.0
    %16 = vst [vmem:[#allocation2 + $0x8] sm:$0xff] 0.0
    %17 = vst [vmem:[#allocation2 + $0x10] sm:$0xff] 0.0
    %18 = vst [vmem:[#allocation2 + $0x18] sm:$0xff] 0.0
    %19 = vst [vmem:[#allocation2 + $0x20] sm:$0xff] 0.0
    %20 = vst [vmem:[#allocation2 + $0x28] sm:$0xff] 0.0
    %21 = vst [vmem:[#allocation2 + $0x30] sm:$0xff] 0.0
    %22 = vst [vmem:[#allocation2 + $0x38] sm:$0xff] 0.0
    %23 = vst [vmem:[#allocation2 + $0x40] sm:$0xff] 0.0
    %24 = vst [vmem:[#allocation2 + $0x48] sm:$0xff] 0.0
    %25 = vst [vmem:[#allocation2 + $0x50] sm:$0xff] 0.0
    %26 = vst [vmem:[#allocation2 + $0x58] sm:$0xff] 0.0
    %27 = vst [vmem:[#allocation2 + $0x60] sm:$0xff] 0.0
    %28 = vst [vmem:[#allocation2 + $0x68] sm:$0xff] 0.0
    %29 = vst [vmem:[#allocation2 + $0x70] sm:$0xff] 0.0
    %30 = vst [vmem:[#allocation2 + $0x78] sm:$0xff] 0.0
    %31 = vst [vmem:[#allocation2 + $0x80] sm:$0xff] 0.0
    %32 = vst [vmem:[#allocation2 + $0x88] sm:$0xff] 0.0
    %33 = vst [vmem:[#allocation2 + $0x90] sm:$0xff] 0.0
    %34 = vst [vmem:[#allocation2 + $0x98] sm:$0xff] 0.0
    %35 = vst [vmem:[#allocation2 + $0xa0] sm:$0xff] 0.0
    %36 = vst [vmem:[#allocation2 + $0xa8] sm:$0xff] 0.0
    %37 = vst [vmem:[#allocation2 + $0xb0] sm:$0xff] 0.0
    %38 = vst [vmem:[#allocation2 + $0xb8] sm:$0xff] 0.0
    %39 = vst [vmem:[#allocation2 + $0xc0] sm:$0xff] 0.0
    %40 = vst [vmem:[#allocation2 + $0xc8] sm:$0xff] 0.0
    %41 = vst [vmem:[#allocation2 + $0xd0] sm:$0xff] 0.0
    %42 = vst [vmem:[#allocation2 + $0xd8] sm:$0xff] 0.0
    %43 = vst [vmem:[#allocation2 + $0xe0] sm:$0xff] 0.0
    %44 = vst [vmem:[#allocation2 + $0xe8] sm:$0xff] 0.0
    %45 = vst [vmem:[#allocation2 + $0xf0] sm:$0xff] 0.0
    %46 = vst [vmem:[#allocation2 + $0xf8] sm:$0xff] 0.0
  $region13: #{sgc_forward.4} parent=0 // pred_fallthru
    _
  %v47 = vld [vmem:[#allocation2] sm:$0xff]
  %v48 = vld [vmem:[#allocation2 + $0x8] sm:$0xff]
  %v49 = vld [vmem:[#allocation2 + $0x10] sm:$0xff]
  %v50 = vld [vmem:[#allocation2 + $0x18] sm:$0xff]
  %v51 = vld [vmem:[#allocation2 + $0x20] sm:$0xff]
  %v52 = vld [vmem:[#allocation2 + $0x28] sm:$0xff]
  %v53 = vld [vmem:[#allocation2 + $0x30] sm:$0xff]
  %v54 = vld [vmem:[#allocation2 + $0x38] sm:$0xff]
  %v55 = vld [vmem:[#allocation2 + $0x40] sm:$0xff]
  %v56 = vld [vmem:[#allocation2 + $0x48] sm:$0xff]
  %v57 = vld [vmem:[#allocation2 + $0x50] sm:$0xff]
  %v58 = vld [vmem:[#allocation2 + $0x58] sm:$0xff]
  %v59 = vld [vmem:[#allocation2 + $0x60] sm:$0xff]
  %v60 = vld [vmem:[#allocation2 + $0x68] sm:$0xff]
  %v61 = vld [vmem:[#allocation2 + $0x70] sm:$0xff]
  %v62 = vld [vmem:[#allocation2 + $0x78] sm:$0xff]
  %v63 = vld [vmem:[#allocation2 + $0x80] sm:$0xff]
  %v64 = vld [vmem:[#allocation2 + $0x88] sm:$0xff]
  %v65 = vld [vmem:[#allocation2 + $0x90] sm:$0xff]
  %v66 = vld [vmem:[#allocation2 + $0x98] sm:$0xff]
  %v67 = vld [vmem:[#allocation2 + $0xa0] sm:$0xff]
  %v68 = vld [vmem:[#allocation2 + $0xa8] sm:$0xff]
  %v69 = vld [vmem:[#allocation2 + $0xb0] sm:$0xff]
  %v70 = vld [vmem:[#allocation2 + $0xb8] sm:$0xff]
  %v71 = vld [vmem:[#allocation2 + $0xc0] sm:$0xff]
  %v72 = vld [vmem:[#allocation2 + $0xc8] sm:$0xff]
  %v73 = vld [vmem:[#allocation2 + $0xd0] sm:$0xff]
  %v74 = vld [vmem:[#allocation2 + $0xd8] sm:$0xff]
  %v75 = vld [vmem:[#allocation2 + $0xe0] sm:$0xff]
  %v76 = vld [vmem:[#allocation2 + $0xe8] sm:$0xff]
  %v77 = vld [vmem:[#allocation2 + $0xf0] sm:$0xff]
  %v78 = vld [vmem:[#allocation2 + $0xf8] sm:$0xff]
  %v79 = vld [vmem:[%s0] sm:$0xff]
  %v80 = vld [vmem:[%s0 + $0x8] sm:$0xff]
  %v81 = vld [vmem:[%s0 + $0x10] sm:$0xff]
  %v82 = vld [vmem:[%s0 + $0x18] sm:$0xff]
  %v83 = vld [vmem:[%s0 + $0x20] sm:$0xff]
  %v84 = vld [vmem:[%s0 + $0x28] sm:$0xff]
  %v85 = vld [vmem:[%s0 + $0x30] sm:$0xff]
  %v86 = vld [vmem:[%s0 + $0x38] sm:$0xff]
  %v87 = vld [vmem:[%s0 + $0x40] sm:$0xff]
  %v88 = vld [vmem:[%s0 + $0x48] sm:$0xff]
  %v89 = vld [vmem:[%s0 + $0x50] sm:$0xff]
  %v90 = vld [vmem:[%s0 + $0x58] sm:$0xff]
  %v91 = vld [vmem:[%s0 + $0x60] sm:$0xff]
  %v92 = vld [vmem:[%s0 + $0x68] sm:$0xff]
  %v93 = vld [vmem:[%s0 + $0x70] sm:$0xff]
  %v94 = vld [vmem:[%s0 + $0x78] sm:$0xff]
  %v95 = vld [vmem:[%s0 + $0x80] sm:$0xff]
  %v96 = vld [vmem:[%s0 + $0x88] sm:$0xff]
  %v97 = vld [vmem:[%s0 + $0x90] sm:$0xff]
  %v98 = vld [vmem:[%s0 + $0x98] sm:$0xff]
  %v99 = vld [vmem:[%s0 + $0xa0] sm:$0xff]
  %v100 = vld [vmem:[%s0 + $0xa8] sm:$0xff]
  %v101 = vld [vmem:[%s0 + $0xb0] sm:$0xff]
  %v102 = vld [vmem:[%s0 + $0xb8] sm:$0xff]
  %v103 = vld [vmem:[%s0 + $0xc0] sm:$0xff]
  %v104 = vld [vmem:[%s0 + $0xc8] sm:$0xff]
  %v105 = vld [vmem:[%s0 + $0xd0] sm:$0xff]
  %v106 = vld [vmem:[%s0 + $0xd8] sm:$0xff]
  %v107 = vld [vmem:[%s0 + $0xe0] sm:$0xff]
  %v108 = vld [vmem:[%s0 + $0xe8] sm:$0xff]
  %v109 = vld [vmem:[%s0 + $0xf0] sm:$0xff]
  %v110 = vld [vmem:[%s0 + $0xf8] sm:$0xff]
  %v111 = vld [vmem:[%s1] sm:$0xf]
  %v112 = vld [vmem:[%s1 + $0x4] sm:$0xf]
  %v113 = vld [vmem:[%s1 + $0x8] sm:$0xf]
  %v114 = vld [vmem:[%s1 + $0xc] sm:$0xf]
  %v115 = vld [vmem:[%s1 + $0x10] sm:$0xf]
  %v116 = vld [vmem:[%s1 + $0x14] sm:$0xf]
  %v117 = vld [vmem:[%s1 + $0x18] sm:$0xf]
  %v118 = vld [vmem:[%s1 + $0x1c] sm:$0xf]
  %v119 = vld [vmem:[%s1 + $0x20] sm:$0xf]
  %v120 = vld [vmem:[%s1 + $0x24] sm:$0xf]
  %v121 = vld [vmem:[%s1 + $0x28] sm:$0xf]
  %v122 = vld [vmem:[%s1 + $0x2c] sm:$0xf]
  %v123 = vld [vmem:[%s1 + $0x30] sm:$0xf]
  %v124 = vld [vmem:[%s1 + $0x34] sm:$0xf]
  %v125 = vld [vmem:[%s1 + $0x38] sm:$0xf]
  %v126 = vld [vmem:[%s1 + $0x3c] sm:$0xf]
  %v127 = vld [vmem:[%s1 + $0x40] sm:$0xf]
  %v128 = vld [vmem:[%s1 + $0x44] sm:$0xf]
  %v129 = vld [vmem:[%s1 + $0x48] sm:$0xf]
  %v130 = vld [vmem:[%s1 + $0x4c] sm:$0xf]
  %v131 = vld [vmem:[%s1 + $0x50] sm:$0xf]
  %v132 = vld [vmem:[%s1 + $0x54] sm:$0xf]
  %v133 = vld [vmem:[%s1 + $0x58] sm:$0xf]
  %v134 = vld [vmem:[%s1 + $0x5c] sm:$0xf]
  %v135 = vld [vmem:[%s1 + $0x60] sm:$0xf]
  %v136 = vld [vmem:[%s1 + $0x64] sm:$0xf]
  %v137 = vld [vmem:[%s1 + $0x68] sm:$0xf]
  %v138 = vld [vmem:[%s1 + $0x6c] sm:$0xf]
  %v139 = vld [vmem:[%s1 + $0x70] sm:$0xf]
  %v140 = vld [vmem:[%s1 + $0x74] sm:$0xf]
  %v141 = vld [vmem:[%s1 + $0x78] sm:$0xf]
  %v142 = vld [vmem:[%s1 + $0x7c] sm:$0xf]
  %v175 = vunpack.c.l.b16 %v79
  %v176 = vunpack.c.h.b16 %v79
  %v177 = vunpack.c.l.b16 %v80
  %v178 = vunpack.c.h.b16 %v80
  %v179 = vunpack.c.l.b16 %v81
  %v180 = vunpack.c.h.b16 %v81
  %v181 = vunpack.c.l.b16 %v82
  %v182 = vunpack.c.h.b16 %v82
  %v183 = vunpack.c.l.b16 %v83
  %v184 = vunpack.c.h.b16 %v83
  %v185 = vunpack.c.l.b16 %v84
  %v186 = vunpack.c.h.b16 %v84
  %v187 = vunpack.c.l.b16 %v85
  %v188 = vunpack.c.h.b16 %v85
  %v189 = vunpack.c.l.b16 %v86
  %v190 = vunpack.c.h.b16 %v86
  %v191 = vunpack.c.l.b16 %v87
  %v192 = vunpack.c.h.b16 %v87
  %v193 = vunpack.c.l.b16 %v88
  %v194 = vunpack.c.h.b16 %v88
  %v195 = vunpack.c.l.b16 %v89
  %v196 = vunpack.c.h.b16 %v89
  %v197 = vunpack.c.l.b16 %v90
  %v198 = vunpack.c.h.b16 %v90
  %v199 = vunpack.c.l.b16 %v91
  %v200 = vunpack.c.h.b16 %v91
  %v201 = vunpack.c.l.b16 %v92
  %v202 = vunpack.c.h.b16 %v92
  %v203 = vunpack.c.l.b16 %v93
  %v204 = vunpack.c.h.b16 %v93
  %v205 = vunpack.c.l.b16 %v94
  %v206 = vunpack.c.h.b16 %v94
  %v207 = vunpack.c.l.b16 %v95
  %v208 = vunpack.c.h.b16 %v95
  %v209 = vunpack.c.l.b16 %v96
  %v210 = vunpack.c.h.b16 %v96
  %v211 = vunpack.c.l.b16 %v97
  %v212 = vunpack.c.h.b16 %v97
  %v213 = vunpack.c.l.b16 %v98
  %v214 = vunpack.c.h.b16 %v98
  %v215 = vunpack.c.l.b16 %v99
  %v216 = vunpack.c.h.b16 %v99
  %v217 = vunpack.c.l.b16 %v100
  %v218 = vunpack.c.h.b16 %v100
  %v219 = vunpack.c.l.b16 %v101
  %v220 = vunpack.c.h.b16 %v101
  %v221 = vunpack.c.l.b16 %v102
  %v222 = vunpack.c.h.b16 %v102
  %v223 = vunpack.c.l.b16 %v103
  %v224 = vunpack.c.h.b16 %v103
  %v225 = vunpack.c.l.b16 %v104
  %v226 = vunpack.c.h.b16 %v104
  %v227 = vunpack.c.l.b16 %v105
  %v228 = vunpack.c.h.b16 %v105
  %v229 = vunpack.c.l.b16 %v106
  %v230 = vunpack.c.h.b16 %v106
  %v231 = vunpack.c.l.b16 %v107
  %v232 = vunpack.c.h.b16 %v107
  %v233 = vunpack.c.l.b16 %v108
  %v234 = vunpack.c.h.b16 %v108
  %v235 = vunpack.c.l.b16 %v109
  %v236 = vunpack.c.h.b16 %v109
  %v237 = vunpack.c.l.b16 %v110
  %v238 = vunpack.c.h.b16 %v110
  %v239 = vpack.c.b16 %v177, %v175
  %v240 = vpack.c.b16 %v178, %v176
  %v241 = vpack.c.b16 %v181, %v179
  %v242 = vpack.c.b16 %v182, %v180
  %v243 = vpack.c.b16 %v185, %v183
  %v244 = vpack.c.b16 %v186, %v184
  %v245 = vpack.c.b16 %v189, %v187
  %v246 = vpack.c.b16 %v190, %v188
  %v247 = vpack.c.b16 %v193, %v191
  %v248 = vpack.c.b16 %v194, %v192
  %v249 = vpack.c.b16 %v197, %v195
  %v250 = vpack.c.b16 %v198, %v196
  %v251 = vpack.c.b16 %v201, %v199
  %v252 = vpack.c.b16 %v202, %v200
  %v253 = vpack.c.b16 %v205, %v203
  %v254 = vpack.c.b16 %v206, %v204
  %v255 = vpack.c.b16 %v209, %v207
  %v256 = vpack.c.b16 %v210, %v208
  %v257 = vpack.c.b16 %v213, %v211
  %v258 = vpack.c.b16 %v214, %v212
  %v259 = vpack.c.b16 %v217, %v215
  %v260 = vpack.c.b16 %v218, %v216
  %v261 = vpack.c.b16 %v221, %v219
  %v262 = vpack.c.b16 %v222, %v220
  %v263 = vpack.c.b16 %v225, %v223
  %v264 = vpack.c.b16 %v226, %v224
  %v265 = vpack.c.b16 %v229, %v227
  %v266 = vpack.c.b16 %v230, %v228
  %v267 = vpack.c.b16 %v233, %v231
  %v268 = vpack.c.b16 %v234, %v232
  %v269 = vpack.c.b16 %v237, %v235
  %v270 = vpack.c.b16 %v238, %v236
  %v335 = vunpack.c.l.b16 %v111
  %v336 = vunpack.c.l.b16 %v112
  %v337 = vunpack.c.l.b16 %v113
  %v338 = vunpack.c.l.b16 %v114
  %v339 = vunpack.c.l.b16 %v115
  %v340 = vunpack.c.l.b16 %v116
  %v341 = vunpack.c.l.b16 %v117
  %v342 = vunpack.c.l.b16 %v118
  %v343 = vunpack.c.l.b16 %v119
  %v344 = vunpack.c.l.b16 %v120
  %v345 = vunpack.c.l.b16 %v121
  %v346 = vunpack.c.l.b16 %v122
  %v347 = vunpack.c.l.b16 %v123
  %v348 = vunpack.c.l.b16 %v124
  %v349 = vunpack.c.l.b16 %v125
  %v350 = vunpack.c.l.b16 %v126
  %v351 = vunpack.c.l.b16 %v127
  %v352 = vunpack.c.l.b16 %v128
  %v353 = vunpack.c.l.b16 %v129
  %v354 = vunpack.c.l.b16 %v130
  %v355 = vunpack.c.l.b16 %v131
  %v356 = vunpack.c.l.b16 %v132
  %v357 = vunpack.c.l.b16 %v133
  %v358 = vunpack.c.l.b16 %v134
  %v359 = vunpack.c.l.b16 %v135
  %v360 = vunpack.c.l.b16 %v136
  %v361 = vunpack.c.l.b16 %v137
  %v362 = vunpack.c.l.b16 %v138
  %v363 = vunpack.c.l.b16 %v139
  %v364 = vunpack.c.l.b16 %v140
  %v365 = vunpack.c.l.b16 %v141
  %v366 = vunpack.c.l.b16 %v142
  %v367 = vpack.c.b16 %v336, %v335
  %v368 = vpack.c.b16 %v338, %v337
  %v369 = vpack.c.b16 %v340, %v339
  %v370 = vpack.c.b16 %v342, %v341
  %v371 = vpack.c.b16 %v344, %v343
  %v372 = vpack.c.b16 %v346, %v345
  %v373 = vpack.c.b16 %v348, %v347
  %v374 = vpack.c.b16 %v350, %v349
  %v375 = vpack.c.b16 %v352, %v351
  %v376 = vpack.c.b16 %v354, %v353
  %v377 = vpack.c.b16 %v356, %v355
  %v378 = vpack.c.b16 %v358, %v357
  %v379 = vpack.c.b16 %v360, %v359
  %v380 = vpack.c.b16 %v362, %v361
  %v381 = vpack.c.b16 %v364, %v363
  %v382 = vpack.c.b16 %v366, %v365
  %399 = vmatpush.bf16.msra.mxu0 %v374
  %400 = vmatpush.bf16.msra.mxu0 %v373
  %401 = vmatpush.bf16.msra.mxu0 %v372
  %402 = vmatpush.bf16.msra.mxu0 %v371
  %403 = vmatpush.bf16.msra.mxu0 %v370
  %404 = vmatpush.bf16.msra.mxu0 %v369
  %405 = vmatpush.bf16.msra.mxu0 %v368
  %406 = vmatpush.bf16.msra.mxu0 %v367
  %407 = vmatmul.bf16.gmra.mxu0 %v239
  %v408 = vpop.f32.mrf.mxu0
  %v409 = vadd.f32 0.0, %v408
  %v410 = vpop.f32.mrf.mxu0
  %v411 = vadd.f32 0.0, %v410
  %412 = vmatmul.bf16.gmra.mxu0 %v241
  %v413 = vpop.f32.mrf.mxu0
  %v414 = vadd.f32 0.0, %v413
  %v415 = vpop.f32.mrf.mxu0
  %v416 = vadd.f32 0.0, %v415
  %417 = vmatmul.bf16.gmra.mxu0 %v243
  %v418 = vpop.f32.mrf.mxu0
  %v419 = vadd.f32 0.0, %v418
  %v420 = vpop.f32.mrf.mxu0
  %v421 = vadd.f32 0.0, %v420
  %422 = vmatmul.bf16.gmra.mxu0 %v245
  %v423 = vpop.f32.mrf.mxu0
  %v424 = vadd.f32 0.0, %v423
  %v425 = vpop.f32.mrf.mxu0
  %v426 = vadd.f32 0.0, %v425
  %427 = vmatmul.bf16.gmra.mxu0 %v247
  %v428 = vpop.f32.mrf.mxu0
  %v429 = vadd.f32 0.0, %v428
  %v430 = vpop.f32.mrf.mxu0
  %v431 = vadd.f32 0.0, %v430
  %432 = vmatmul.bf16.gmra.mxu0 %v249
  %v433 = vpop.f32.mrf.mxu0
  %v434 = vadd.f32 0.0, %v433
  %v435 = vpop.f32.mrf.mxu0
  %v436 = vadd.f32 0.0, %v435
  %437 = vmatmul.bf16.gmra.mxu0 %v251
  %v438 = vpop.f32.mrf.mxu0
  %v439 = vadd.f32 0.0, %v438
  %v440 = vpop.f32.mrf.mxu0
  %v441 = vadd.f32 0.0, %v440
  %442 = vmatmul.bf16.gmra.mxu0 %v253
  %v443 = vpop.f32.mrf.mxu0
  %v444 = vadd.f32 0.0, %v443
  %v445 = vpop.f32.mrf.mxu0
  %v446 = vadd.f32 0.0, %v445
  %447 = vmatmul.bf16.gmra.mxu0 %v255
  %v448 = vpop.f32.mrf.mxu0
  %v449 = vadd.f32 0.0, %v448
  %v450 = vpop.f32.mrf.mxu0
  %v451 = vadd.f32 0.0, %v450
  %452 = vmatmul.bf16.gmra.mxu0 %v257
  %v453 = vpop.f32.mrf.mxu0
  %v454 = vadd.f32 0.0, %v453
  %v455 = vpop.f32.mrf.mxu0
  %v456 = vadd.f32 0.0, %v455
  %457 = vmatmul.bf16.gmra.mxu0 %v259
  %v458 = vpop.f32.mrf.mxu0
  %v459 = vadd.f32 0.0, %v458
  %v460 = vpop.f32.mrf.mxu0
  %v461 = vadd.f32 0.0, %v460
  %462 = vmatmul.bf16.gmra.mxu0 %v261
  %v463 = vpop.f32.mrf.mxu0
  %v464 = vadd.f32 0.0, %v463
  %v465 = vpop.f32.mrf.mxu0
  %v466 = vadd.f32 0.0, %v465
  %467 = vmatmul.bf16.gmra.mxu0 %v263
  %v468 = vpop.f32.mrf.mxu0
  %v469 = vadd.f32 0.0, %v468
  %v470 = vpop.f32.mrf.mxu0
  %v471 = vadd.f32 0.0, %v470
  %472 = vmatmul.bf16.gmra.mxu0 %v265
  %v473 = vpop.f32.mrf.mxu0
  %v474 = vadd.f32 0.0, %v473
  %v475 = vpop.f32.mrf.mxu0
  %v476 = vadd.f32 0.0, %v475
  %477 = vmatmul.bf16.gmra.mxu0 %v267
  %v478 = vpop.f32.mrf.mxu0
  %v479 = vadd.f32 0.0, %v478
  %v480 = vpop.f32.mrf.mxu0
  %v481 = vadd.f32 0.0, %v480
  %482 = vmatmul.bf16.gmra.mxu0 %v269
  %v483 = vpop.f32.mrf.mxu0
  %v484 = vadd.f32 0.0, %v483
  %v485 = vpop.f32.mrf.mxu0
  %v486 = vadd.f32 0.0, %v485
  %487 = vdwg.mxu0
  %488 = vmatpush.bf16.msra.mxu0 %v382
  %489 = vmatpush.bf16.msra.mxu0 %v381
  %490 = vmatpush.bf16.msra.mxu0 %v380
  %491 = vmatpush.bf16.msra.mxu0 %v379
  %492 = vmatpush.bf16.msra.mxu0 %v378
  %493 = vmatpush.bf16.msra.mxu0 %v377
  %494 = vmatpush.bf16.msra.mxu0 %v376
  %495 = vmatpush.bf16.msra.mxu0 %v375
  %496 = vmatmul.bf16.gmra.mxu0 %v240
  %v497 = vpop.f32.mrf.mxu0
  %v498 = vadd.f32 %v409, %v497
  %v499 = vpop.f32.mrf.mxu0
  %v500 = vadd.f32 %v411, %v499
  %501 = vmatmul.bf16.gmra.mxu0 %v242
  %v502 = vpop.f32.mrf.mxu0
  %v503 = vadd.f32 %v414, %v502
  %v504 = vpop.f32.mrf.mxu0
  %v505 = vadd.f32 %v416, %v504
  %506 = vmatmul.bf16.gmra.mxu0 %v244
  %v507 = vpop.f32.mrf.mxu0
  %v508 = vadd.f32 %v419, %v507
  %v509 = vpop.f32.mrf.mxu0
  %v510 = vadd.f32 %v421, %v509
  %511 = vmatmul.bf16.gmra.mxu0 %v246
  %v512 = vpop.f32.mrf.mxu0
  %v513 = vadd.f32 %v424, %v512
  %v514 = vpop.f32.mrf.mxu0
  %v515 = vadd.f32 %v426, %v514
  %516 = vmatmul.bf16.gmra.mxu0 %v248
  %v517 = vpop.f32.mrf.mxu0
  %v518 = vadd.f32 %v429, %v517
  %v519 = vpop.f32.mrf.mxu0
  %v520 = vadd.f32 %v431, %v519
  %521 = vmatmul.bf16.gmra.mxu0 %v250
  %v522 = vpop.f32.mrf.mxu0
  %v523 = vadd.f32 %v434, %v522
  %v524 = vpop.f32.mrf.mxu0
  %v525 = vadd.f32 %v436, %v524
  %526 = vmatmul.bf16.gmra.mxu0 %v252
  %v527 = vpop.f32.mrf.mxu0
  %v528 = vadd.f32 %v439, %v527
  %v529 = vpop.f32.mrf.mxu0
  %v530 = vadd.f32 %v441, %v529
  %531 = vmatmul.bf16.gmra.mxu0 %v254
  %v532 = vpop.f32.mrf.mxu0
  %v533 = vadd.f32 %v444, %v532
  %v534 = vpop.f32.mrf.mxu0
  %v535 = vadd.f32 %v446, %v534
  %536 = vmatmul.bf16.gmra.mxu0 %v256
  %v537 = vpop.f32.mrf.mxu0
  %v538 = vadd.f32 %v449, %v537
  %v539 = vpop.f32.mrf.mxu0
  %v540 = vadd.f32 %v451, %v539
  %541 = vmatmul.bf16.gmra.mxu0 %v258
  %v542 = vpop.f32.mrf.mxu0
  %v543 = vadd.f32 %v454, %v542
  %v544 = vpop.f32.mrf.mxu0
  %v545 = vadd.f32 %v456, %v544
  %546 = vmatmul.bf16.gmra.mxu0 %v260
  %v547 = vpop.f32.mrf.mxu0
  %v548 = vadd.f32 %v459, %v547
  %v549 = vpop.f32.mrf.mxu0
  %v550 = vadd.f32 %v461, %v549
  %551 = vmatmul.bf16.gmra.mxu0 %v262
  %v552 = vpop.f32.mrf.mxu0
  %v553 = vadd.f32 %v464, %v552
  %v554 = vpop.f32.mrf.mxu0
  %v555 = vadd.f32 %v466, %v554
  %556 = vmatmul.bf16.gmra.mxu0 %v264
  %v557 = vpop.f32.mrf.mxu0
  %v558 = vadd.f32 %v469, %v557
  %v559 = vpop.f32.mrf.mxu0
  %v560 = vadd.f32 %v471, %v559
  %561 = vmatmul.bf16.gmra.mxu0 %v266
  %v562 = vpop.f32.mrf.mxu0
  %v563 = vadd.f32 %v474, %v562
  %v564 = vpop.f32.mrf.mxu0
  %v565 = vadd.f32 %v476, %v564
  %566 = vmatmul.bf16.gmra.mxu0 %v268
  %v567 = vpop.f32.mrf.mxu0
  %v568 = vadd.f32 %v479, %v567
  %v569 = vpop.f32.mrf.mxu0
  %v570 = vadd.f32 %v481, %v569
  %571 = vmatmul.bf16.gmra.mxu0 %v270
  %v572 = vpop.f32.mrf.mxu0
  %v573 = vadd.f32 %v484, %v572
  %v574 = vpop.f32.mrf.mxu0
  %v575 = vadd.f32 %v486, %v574
  %576 = vdwg.mxu0
  %v577 = vadd.f32 %v47, %v498
  %v578 = vadd.f32 %v48, %v500
  %v579 = vadd.f32 %v49, %v503
  %v580 = vadd.f32 %v50, %v505
  %v581 = vadd.f32 %v51, %v508
  %v582 = vadd.f32 %v52, %v510
  %v583 = vadd.f32 %v53, %v513
  %v584 = vadd.f32 %v54, %v515
  %v585 = vadd.f32 %v55, %v518
  %v586 = vadd.f32 %v56, %v520
  %v587 = vadd.f32 %v57, %v523
  %v588 = vadd.f32 %v58, %v525
  %v589 = vadd.f32 %v59, %v528
  %v590 = vadd.f32 %v60, %v530
  %v591 = vadd.f32 %v61, %v533
  %v592 = vadd.f32 %v62, %v535
  %v593 = vadd.f32 %v63, %v538
  %v594 = vadd.f32 %v64, %v540
  %v595 = vadd.f32 %v65, %v543
  %v596 = vadd.f32 %v66, %v545
  %v597 = vadd.f32 %v67, %v548
  %v598 = vadd.f32 %v68, %v550
  %v599 = vadd.f32 %v69, %v553
  %v600 = vadd.f32 %v70, %v555
  %v601 = vadd.f32 %v71, %v558
  %v602 = vadd.f32 %v72, %v560
  %v603 = vadd.f32 %v73, %v563
  %v604 = vadd.f32 %v74, %v565
  %v605 = vadd.f32 %v75, %v568
  %v606 = vadd.f32 %v76, %v570
  %v607 = vadd.f32 %v77, %v573
  %v608 = vadd.f32 %v78, %v575
  %609 = vst [vmem:[#allocation2] sm:$0xff] %v577
  %610 = vst [vmem:[#allocation2 + $0x8] sm:$0xff] %v578
  %611 = vst [vmem:[#allocation2 + $0x10] sm:$0xff] %v579
  %612 = vst [vmem:[#allocation2 + $0x18] sm:$0xff] %v580
  %613 = vst [vmem:[#allocation2 + $0x20] sm:$0xff] %v581
  %614 = vst [vmem:[#allocation2 + $0x28] sm:$0xff] %v582
  %615 = vst [vmem:[#allocation2 + $0x30] sm:$0xff] %v583
  %616 = vst [vmem:[#allocation2 + $0x38] sm:$0xff] %v584
  %617 = vst [vmem:[#allocation2 + $0x40] sm:$0xff] %v585
  %618 = vst [vmem:[#allocation2 + $0x48] sm:$0xff] %v586
  %619 = vst [vmem:[#allocation2 + $0x50] sm:$0xff] %v587
  %620 = vst [vmem:[#allocation2 + $0x58] sm:$0xff] %v588
  %621 = vst [vmem:[#allocation2 + $0x60] sm:$0xff] %v589
  %622 = vst [vmem:[#allocation2 + $0x68] sm:$0xff] %v590
  %623 = vst [vmem:[#allocation2 + $0x70] sm:$0xff] %v591
  %624 = vst [vmem:[#allocation2 + $0x78] sm:$0xff] %v592
  %625 = vst [vmem:[#allocation2 + $0x80] sm:$0xff] %v593
  %626 = vst [vmem:[#allocation2 + $0x88] sm:$0xff] %v594
  %627 = vst [vmem:[#allocation2 + $0x90] sm:$0xff] %v595
  %628 = vst [vmem:[#allocation2 + $0x98] sm:$0xff] %v596
  %629 = vst [vmem:[#allocation2 + $0xa0] sm:$0xff] %v597
  %630 = vst [vmem:[#allocation2 + $0xa8] sm:$0xff] %v598
  %631 = vst [vmem:[#allocation2 + $0xb0] sm:$0xff] %v599
  %632 = vst [vmem:[#allocation2 + $0xb8] sm:$0xff] %v600
  %633 = vst [vmem:[#allocation2 + $0xc0] sm:$0xff] %v601
  %634 = vst [vmem:[#allocation2 + $0xc8] sm:$0xff] %v602
  %635 = vst [vmem:[#allocation2 + $0xd0] sm:$0xff] %v603
  %636 = vst [vmem:[#allocation2 + $0xd8] sm:$0xff] %v604
  %637 = vst [vmem:[#allocation2 + $0xe0] sm:$0xff] %v605
  %638 = vst [vmem:[#allocation2 + $0xe8] sm:$0xff] %v606
  %639 = vst [vmem:[#allocation2 + $0xf0] sm:$0xff] %v607
  %640 = vst [vmem:[#allocation2 + $0xf8] sm:$0xff] %v608
  // Predicated region
  $region14: #{sgc_forward.4} parent=0 // pred_check
    %p641 = pneg %p11
  $region15: #{sgc_forward.4} parent=0 // pred_check_branch
    %643 = sbr.rel (%p641) target = $region17
  $region16: #{sgc_forward.4} parent=0 // pred_region
    %v644 = vld [vmem:[#allocation2] sm:$0xff]
    %v645 = vld [vmem:[#allocation2 + $0x8] sm:$0xff]
    %v646 = vld [vmem:[#allocation2 + $0x10] sm:$0xff]
    %v647 = vld [vmem:[#allocation2 + $0x18] sm:$0xff]
    %v648 = vld [vmem:[#allocation2 + $0x20] sm:$0xff]
    %v649 = vld [vmem:[#allocation2 + $0x28] sm:$0xff]
    %v650 = vld [vmem:[#allocation2 + $0x30] sm:$0xff]
    %v651 = vld [vmem:[#allocation2 + $0x38] sm:$0xff]
    %v652 = vld [vmem:[#allocation2 + $0x40] sm:$0xff]
    %v653 = vld [vmem:[#allocation2 + $0x48] sm:$0xff]
    %v654 = vld [vmem:[#allocation2 + $0x50] sm:$0xff]
    %v655 = vld [vmem:[#allocation2 + $0x58] sm:$0xff]
    %v656 = vld [vmem:[#allocation2 + $0x60] sm:$0xff]
    %v657 = vld [vmem:[#allocation2 + $0x68] sm:$0xff]
    %v658 = vld [vmem:[#allocation2 + $0x70] sm:$0xff]
    %v659 = vld [vmem:[#allocation2 + $0x78] sm:$0xff]
    %v660 = vld [vmem:[#allocation2 + $0x80] sm:$0xff]
    %v661 = vld [vmem:[#allocation2 + $0x88] sm:$0xff]
    %v662 = vld [vmem:[#allocation2 + $0x90] sm:$0xff]
    %v663 = vld [vmem:[#allocation2 + $0x98] sm:$0xff]
    %v664 = vld [vmem:[#allocation2 + $0xa0] sm:$0xff]
    %v665 = vld [vmem:[#allocation2 + $0xa8] sm:$0xff]
    %v666 = vld [vmem:[#allocation2 + $0xb0] sm:$0xff]
    %v667 = vld [vmem:[#allocation2 + $0xb8] sm:$0xff]
    %v668 = vld [vmem:[#allocation2 + $0xc0] sm:$0xff]
    %v669 = vld [vmem:[#allocation2 + $0xc8] sm:$0xff]
    %v670 = vld [vmem:[#allocation2 + $0xd0] sm:$0xff]
    %v671 = vld [vmem:[#allocation2 + $0xd8] sm:$0xff]
    %v672 = vld [vmem:[#allocation2 + $0xe0] sm:$0xff]
    %v673 = vld [vmem:[#allocation2 + $0xe8] sm:$0xff]
    %v674 = vld [vmem:[#allocation2 + $0xf0] sm:$0xff]
    %v675 = vld [vmem:[#allocation2 + $0xf8] sm:$0xff]
    %v676 = vpack.c.bf16 %v644, %v644
    %v677 = vpack.c.bf16 %v645, %v645
    %v678 = vpack.c.bf16 %v646, %v646
    %v679 = vpack.c.bf16 %v647, %v647
    %v680 = vpack.c.bf16 %v648, %v648
    %v681 = vpack.c.bf16 %v649, %v649
    %v682 = vpack.c.bf16 %v650, %v650
    %v683 = vpack.c.bf16 %v651, %v651
    %v684 = vpack.c.bf16 %v652, %v652
    %v685 = vpack.c.bf16 %v653, %v653
    %v686 = vpack.c.bf16 %v654, %v654
    %v687 = vpack.c.bf16 %v655, %v655
    %v688 = vpack.c.bf16 %v656, %v656
    %v689 = vpack.c.bf16 %v657, %v657
    %v690 = vpack.c.bf16 %v658, %v658
    %v691 = vpack.c.bf16 %v659, %v659
    %v692 = vpack.c.bf16 %v660, %v660
    %v693 = vpack.c.bf16 %v661, %v661
    %v694 = vpack.c.bf16 %v662, %v662
    %v695 = vpack.c.bf16 %v663, %v663
    %v696 = vpack.c.bf16 %v664, %v664
    %v697 = vpack.c.bf16 %v665, %v665
    %v698 = vpack.c.bf16 %v666, %v666
    %v699 = vpack.c.bf16 %v667, %v667
    %v700 = vpack.c.bf16 %v668, %v668
    %v701 = vpack.c.bf16 %v669, %v669
    %v702 = vpack.c.bf16 %v670, %v670
    %v703 = vpack.c.bf16 %v671, %v671
    %v704 = vpack.c.bf16 %v672, %v672
    %v705 = vpack.c.bf16 %v673, %v673
    %v706 = vpack.c.bf16 %v674, %v674
    %v707 = vpack.c.bf16 %v675, %v675
    %708 = vst [vmem:[%s2] sm:$0xf] %v676
    %709 = vst [vmem:[%s2 + $0x4] sm:$0xf] %v677
    %710 = vst [vmem:[%s2 + $0x8] sm:$0xf] %v678
    %711 = vst [vmem:[%s2 + $0xc] sm:$0xf] %v679
    %712 = vst [vmem:[%s2 + $0x10] sm:$0xf] %v680
    %713 = vst [vmem:[%s2 + $0x14] sm:$0xf] %v681
    %714 = vst [vmem:[%s2 + $0x18] sm:$0xf] %v682
    %715 = vst [vmem:[%s2 + $0x1c] sm:$0xf] %v683
    %716 = vst [vmem:[%s2 + $0x20] sm:$0xf] %v684
    %717 = vst [vmem:[%s2 + $0x24] sm:$0xf] %v685
    %718 = vst [vmem:[%s2 + $0x28] sm:$0xf] %v686
    %719 = vst [vmem:[%s2 + $0x2c] sm:$0xf] %v687
    %720 = vst [vmem:[%s2 + $0x30] sm:$0xf] %v688
    %721 = vst [vmem:[%s2 + $0x34] sm:$0xf] %v689
    %722 = vst [vmem:[%s2 + $0x38] sm:$0xf] %v690
    %723 = vst [vmem:[%s2 + $0x3c] sm:$0xf] %v691
    %724 = vst [vmem:[%s2 + $0x40] sm:$0xf] %v692
    %725 = vst [vmem:[%s2 + $0x44] sm:$0xf] %v693
    %726 = vst [vmem:[%s2 + $0x48] sm:$0xf] %v694
    %727 = vst [vmem:[%s2 + $0x4c] sm:$0xf] %v695
    %728 = vst [vmem:[%s2 + $0x50] sm:$0xf] %v696
    %729 = vst [vmem:[%s2 + $0x54] sm:$0xf] %v697
    %730 = vst [vmem:[%s2 + $0x58] sm:$0xf] %v698
    %731 = vst [vmem:[%s2 + $0x5c] sm:$0xf] %v699
    %732 = vst [vmem:[%s2 + $0x60] sm:$0xf] %v700
    %733 = vst [vmem:[%s2 + $0x64] sm:$0xf] %v701
    %734 = vst [vmem:[%s2 + $0x68] sm:$0xf] %v702
    %735 = vst [vmem:[%s2 + $0x6c] sm:$0xf] %v703
    %736 = vst [vmem:[%s2 + $0x70] sm:$0xf] %v704
    %737 = vst [vmem:[%s2 + $0x74] sm:$0xf] %v705
    %738 = vst [vmem:[%s2 + $0x78] sm:$0xf] %v706
    %739 = vst [vmem:[%s2 + $0x7c] sm:$0xf] %v707
  $region17: #{sgc_forward.4} parent=0 // pred_fallthru
    _
  // Predicated region
  $region18: #{sgc_forward.4} parent=0 // pred_check
    _
  $region19: #{sgc_forward.4} parent=0 // pred_check_branch
    %741 = sbr.rel (0) target = $region21
  $region20: #{sgc_forward.4} parent=0 // pred_region
    _
  $region21: #{sgc_forward.4} parent=0 // pred_fallthru
    _
  // Predicated region
  $region22: #{sgc_forward.4} parent=0 // pred_check
    _
  $region23: #{sgc_forward.4} parent=0 // pred_check_branch
    %743 = sbr.rel (0) target = $region25
  $region24: #{sgc_forward.4} parent=0 // pred_region
    _
  $region25: #{sgc_forward.4} parent=0 // pred_fallthru
    _

</llo_original>
